<compile_context>
chip_gen: v7x
topology: tpu7x:2x2x1
jax: 0.10.0
libtpu: 0.0.40
codegen_flags: <defaults>
</compile_context>

<pallas_src>
import jax
import jax.numpy as jnp
from jax import lax
from jax.experimental import pallas as pl
from jax.experimental.pallas import tpu as pltpu


def _round_up(n, m):
    return ((n + m - 1) // m) * m


def _make_rnn_kernel(T, B, Hp, unroll):
    """Kernel over padded shapes. B = B_pad (sublane tile), Hp = H_pad (lane tile)."""

    def kernel(u1_ref, w_hh1_ref, w_ih2_ref, w_hh2_ref, b2_ref, out_ref,
               h1_scr, u2_scr):
        # u1_ref : (T*B, Hp) f32   precomputed x@W_ih1^T + b1 (time-major, padded)
        # w_hh1  : (Hp, Hp)  bf16  recurrent weight, layer 1 (transposed, padded)
        # w_ih2  : (Hp, Hp)  bf16  input weight,    layer 2 (transposed, padded)
        # w_hh2  : (Hp, Hp)  bf16  recurrent weight, layer 2 (transposed, padded)
        # b2     : (1, Hp)   f32   fused layer-2 bias (b_ih2 + b_hh2, padded)
        # out    : (B, Hp)   f32   h2 at the last timestep
        # h1_scr : (T*B, Hp) f32   all layer-1 hidden states
        # u2_scr : (T*B, Hp) f32   layer-2 pre-activations (input half)

        # ---- layer-1 recurrence: h1_t = tanh(u1_t + h1_{t-1} @ W_hh1) ----
        def step1(t, h1_bf):
            start = pl.multiple_of(t * B, B)
            pre = u1_ref[pl.ds(start, B), :] + jnp.dot(
                h1_bf, w_hh1_ref[...], preferred_element_type=jnp.float32)
            h1_new = jnp.tanh(pre)                       # f32 tanh (v5e-safe)
            h1_scr[pl.ds(start, B), :] = h1_new
            return h1_new.astype(jnp.bfloat16)           # MXU operand for t+1

        lax.fori_loop(0, T, step1, jnp.zeros((B, Hp), jnp.bfloat16),
                      unroll=unroll)

        # ---- layer-2 input projection: ONE batched MXU matmul off the chain,
        #      bias folded in here (free filler, not on the recurrence). ----
        u2_scr[...] = jnp.dot(
            h1_scr[...].astype(jnp.bfloat16), w_ih2_ref[...],
            preferred_element_type=jnp.float32) + b2_ref[...]

        # ---- layer-2 recurrence: h2_t = tanh(u2_t + h2_{t-1} @ W_hh2) ----
        def step2(t, h2):
            start = pl.multiple_of(t * B, B)
            pre = u2_scr[pl.ds(start, B), :] + jnp.dot(
                h2.astype(jnp.bfloat16), w_hh2_ref[...],
                preferred_element_type=jnp.float32)
            return jnp.tanh(pre)

        h2_last = lax.fori_loop(0, T, step2, jnp.zeros((B, Hp), jnp.float32),
                                unroll=unroll)
        out_ref[...] = h2_last

    return kernel


@jax.jit
def rnn_model_forward(x, params):
    """x: (batch, seq, input_size) float32, batch_first like PyTorch."""
    B, T, I = x.shape
    H = params["w_hh1"].shape[0]

    B_pad = _round_up(B, 8)       # sublane tile
    H_pad = _round_up(H, 128)     # lane tile

    # Hoisted layer-1 input projection at the true I (no I padding), bias fused,
    # time-major, zero-padded, flattened to (T*B_pad, H_pad) so every kernel
    # access is a full-tile static slice.
    b1 = params["b_ih1"] + params["b_hh1"]
    u1 = jnp.einsum("bti,hi->tbh", x, params["w_ih1"]) + b1          # (T, B, H)
    u1_pad = (jnp.zeros((T, B_pad, H_pad), jnp.float32)
              .at[:, :B, :H].set(u1)
              .reshape(T * B_pad, H_pad))

    # Recurrent / layer-2 input weights: transposed, zero-padded, bf16 (MXU).
    def pad_w(w):
        return (jnp.zeros((H_pad, H_pad), jnp.float32)
                .at[:H, :H].set(w.T).astype(jnp.bfloat16))

    w_hh1 = pad_w(params["w_hh1"])
    w_ih2 = pad_w(params["w_ih2"])
    w_hh2 = pad_w(params["w_hh2"])

    # Fused layer-2 bias (folded into the batched projection inside the kernel).
    b2 = (jnp.zeros((1, H_pad), jnp.float32)
          .at[0, :H].set(params["b_ih2"] + params["b_hh2"]))

    unroll = True if T <= 16 else 8
    kernel = _make_rnn_kernel(T, B_pad, H_pad, unroll)

    vmem = pl.BlockSpec(memory_space=pltpu.MemorySpace.VMEM)
    h2_last = pl.pallas_call(
        kernel,
        out_shape=jax.ShapeDtypeStruct((B_pad, H_pad), jnp.float32),
        in_specs=[vmem, vmem, vmem, vmem, vmem],
        out_specs=vmem,
        scratch_shapes=[
            pltpu.VMEM((T * B_pad, H_pad), jnp.float32),   # h1 over all t
            pltpu.VMEM((T * B_pad, H_pad), jnp.float32),   # u2 over all t
        ],
    )(u1_pad, w_hh1, w_ih2, w_hh2, b2)

    # fc(H -> 1) on the last hidden state, done here (lane-dense kernel output,
    # no N=1 masked-lane MXU matmul inside the kernel).
    h2 = h2_last[:B, :H]
    return h2 @ params["w_fc"].T + params["b_fc"]


def rnn_model_reference(x, params):
    """Pure-JAX f32 reference of the same forward (PyTorch nn.RNN semantics)."""
    B, T, I = x.shape
    H = params["w_hh1"].shape[0]
    h1 = jnp.zeros((B, H), jnp.float32)
    h2 = jnp.zeros((B, H), jnp.float32)
    for t in range(T):
        xt = x[:, t, :]
        h1 = jnp.tanh(xt @ params["w_ih1"].T + params["b_ih1"]
                      + h1 @ params["w_hh1"].T + params["b_hh1"])
        h2 = jnp.tanh(h1 @ params["w_ih2"].T + params["b_ih2"]
                      + h2 @ params["w_hh2"].T + params["b_hh2"])
    return h2 @ params["w_fc"].T + params["b_fc"]


def init_params(key, input_size, hidden_size):
    """Deterministic synthetic parameters matching nn.RNN(I,H,2) + nn.Linear(H,1)."""
    ks = jax.random.split(key, 10)
    s = 0.1
    return {
        "w_ih1": s * jax.random.normal(ks[0], (hidden_size, input_size), jnp.float32),
        "w_hh1": s * jax.random.normal(ks[1], (hidden_size, hidden_size), jnp.float32),
        "b_ih1": s * jax.random.normal(ks[2], (hidden_size,), jnp.float32),
        "b_hh1": s * jax.random.normal(ks[3], (hidden_size,), jnp.float32),
        "w_ih2": s * jax.random.normal(ks[4], (hidden_size, hidden_size), jnp.float32),
        "w_hh2": s * jax.random.normal(ks[5], (hidden_size, hidden_size), jnp.float32),
        "b_ih2": s * jax.random.normal(ks[6], (hidden_size,), jnp.float32),
        "b_hh2": s * jax.random.normal(ks[7], (hidden_size,), jnp.float32),
        "w_fc": s * jax.random.normal(ks[8], (1, hidden_size), jnp.float32),
        "b_fc": s * jax.random.normal(ks[9], (1,), jnp.float32),
    }


if __name__ == "__main__":
    B, T, I, H = 2, 8, 4, 32  # batch, seq, input_size, hidden_size

    key = jax.random.PRNGKey(0)
    kx, kp = jax.random.split(key)
    x = jax.random.normal(kx, (B, T, I), jnp.float32)
    params = init_params(kp, I, H)

    out = jax.block_until_ready(rnn_model_forward(x, params))
    ref = rnn_model_reference(x, params)

    assert out.shape == (B, 1), out.shape
    # Tolerance accounts for bf16 matmul operands (f32 accumulation) vs f32 reference.
    assert jnp.allclose(out, ref, atol=2e-2, rtol=2e-2), (out, ref)

    print("KERNEL_OK")
</pallas_src>

<mosaic_0001>
module attributes {stable_mosaic.version = 11 : i64} {
  func.func @kernel(%arg0: memref<64x128xf32, #tpu.memory_space<vmem>>, %arg1: memref<128x128xbf16, #tpu.memory_space<vmem>>, %arg2: memref<128x128xbf16, #tpu.memory_space<vmem>>, %arg3: memref<128x128xbf16, #tpu.memory_space<vmem>>, %arg4: memref<1x128xf32, #tpu.memory_space<vmem>>, %arg5: memref<8x128xf32, #tpu.memory_space<vmem>>, %arg6: memref<64x128xf32, #tpu.memory_space<vmem>>, %arg7: memref<64x128xf32, #tpu.memory_space<vmem>>) attributes {dimension_semantics = [], scalar_prefetch = 0 : i64, scratch_operands = 2 : i64, tpu.core_type = #tpu.core_type<tc>} {
    %cst = arith.constant 0.000000e+00 : bf16
    %0 = vector.broadcast %cst : bf16 to vector<8x128xbf16>
    %c0_i32 = arith.constant 0 : i32
    %c8_i32 = arith.constant 8 : i32
    %1 = arith.muli %c0_i32, %c8_i32 : i32
    %2 = tpu.assume_multiple %1, 8 : i32
    %3 = arith.index_cast %2 : i32 to index
    %c0 = arith.constant 0 : index
    %4 = vector.load %arg0[%3, %c0] : memref<64x128xf32, #tpu.memory_space<vmem>>, vector<8x128xf32>
    %c0_0 = arith.constant 0 : index
    %c0_1 = arith.constant 0 : index
    %5 = vector.load %arg1[%c0_0, %c0_1] : memref<128x128xbf16, #tpu.memory_space<vmem>>, vector<128x128xbf16>
    %cst_2 = arith.constant dense<0.000000e+00> : vector<8x128xf32>
    %6 = tpu.matmul %0, %5, %cst_2 {dimension_numbers = #tpu.dot_dimension_numbers<[1], [0], [0], [1], [0, 0, 1, 1], [], []>} : vector<8x128xbf16>, vector<128x128xbf16>, vector<8x128xf32> -> vector<8x128xf32>
    %7 = arith.addf %4, %6 : vector<8x128xf32>
    %8 = math.tanh %7 : vector<8x128xf32>
    %9 = arith.index_cast %2 : i32 to index
    %c0_3 = arith.constant 0 : index
    %10 = vector.load %arg6[%9, %c0_3] : memref<64x128xf32, #tpu.memory_space<vmem>>, vector<8x128xf32>
    tpu.vector_store %arg6[%9, %c0_3], %8 {strides = array<i32>} : memref<64x128xf32, #tpu.memory_space<vmem>>, vector<8x128xf32>,
    %11 = arith.truncf %8 : vector<8x128xf32> to vector<8x128xbf16>
    %c1_i32 = arith.constant 1 : i32
    %c8_i32_4 = arith.constant 8 : i32
    %12 = arith.muli %c1_i32, %c8_i32_4 : i32
    %13 = tpu.assume_multiple %12, 8 : i32
    %14 = arith.index_cast %13 : i32 to index
    %c0_5 = arith.constant 0 : index
    %15 = vector.load %arg0[%14, %c0_5] : memref<64x128xf32, #tpu.memory_space<vmem>>, vector<8x128xf32>
    %c0_6 = arith.constant 0 : index
    %c0_7 = arith.constant 0 : index
    %16 = vector.load %arg1[%c0_6, %c0_7] : memref<128x128xbf16, #tpu.memory_space<vmem>>, vector<128x128xbf16>
    %cst_8 = arith.constant dense<0.000000e+00> : vector<8x128xf32>
    %17 = tpu.matmul %11, %16, %cst_8 {dimension_numbers = #tpu.dot_dimension_numbers<[1], [0], [0], [1], [0, 0, 1, 1], [], []>} : vector<8x128xbf16>, vector<128x128xbf16>, vector<8x128xf32> -> vector<8x128xf32>
    %18 = arith.addf %15, %17 : vector<8x128xf32>
    %19 = math.tanh %18 : vector<8x128xf32>
    %20 = arith.index_cast %13 : i32 to index
    %c0_9 = arith.constant 0 : index
    %21 = vector.load %arg6[%20, %c0_9] : memref<64x128xf32, #tpu.memory_space<vmem>>, vector<8x128xf32>
    tpu.vector_store %arg6[%20, %c0_9], %19 {strides = array<i32>} : memref<64x128xf32, #tpu.memory_space<vmem>>, vector<8x128xf32>,
    %22 = arith.truncf %19 : vector<8x128xf32> to vector<8x128xbf16>
    %c2_i32 = arith.constant 2 : i32
    %c8_i32_10 = arith.constant 8 : i32
    %23 = arith.muli %c2_i32, %c8_i32_10 : i32
    %24 = tpu.assume_multiple %23, 8 : i32
    %25 = arith.index_cast %24 : i32 to index
    %c0_11 = arith.constant 0 : index
    %26 = vector.load %arg0[%25, %c0_11] : memref<64x128xf32, #tpu.memory_space<vmem>>, vector<8x128xf32>
    %c0_12 = arith.constant 0 : index
    %c0_13 = arith.constant 0 : index
    %27 = vector.load %arg1[%c0_12, %c0_13] : memref<128x128xbf16, #tpu.memory_space<vmem>>, vector<128x128xbf16>
    %cst_14 = arith.constant dense<0.000000e+00> : vector<8x128xf32>
    %28 = tpu.matmul %22, %27, %cst_14 {dimension_numbers = #tpu.dot_dimension_numbers<[1], [0], [0], [1], [0, 0, 1, 1], [], []>} : vector<8x128xbf16>, vector<128x128xbf16>, vector<8x128xf32> -> vector<8x128xf32>
    %29 = arith.addf %26, %28 : vector<8x128xf32>
    %30 = math.tanh %29 : vector<8x128xf32>
    %31 = arith.index_cast %24 : i32 to index
    %c0_15 = arith.constant 0 : index
    %32 = vector.load %arg6[%31, %c0_15] : memref<64x128xf32, #tpu.memory_space<vmem>>, vector<8x128xf32>
    tpu.vector_store %arg6[%31, %c0_15], %30 {strides = array<i32>} : memref<64x128xf32, #tpu.memory_space<vmem>>, vector<8x128xf32>,
    %33 = arith.truncf %30 : vector<8x128xf32> to vector<8x128xbf16>
    %c3_i32 = arith.constant 3 : i32
    %c8_i32_16 = arith.constant 8 : i32
    %34 = arith.muli %c3_i32, %c8_i32_16 : i32
    %35 = tpu.assume_multiple %34, 8 : i32
    %36 = arith.index_cast %35 : i32 to index
    %c0_17 = arith.constant 0 : index
    %37 = vector.load %arg0[%36, %c0_17] : memref<64x128xf32, #tpu.memory_space<vmem>>, vector<8x128xf32>
    %c0_18 = arith.constant 0 : index
    %c0_19 = arith.constant 0 : index
    %38 = vector.load %arg1[%c0_18, %c0_19] : memref<128x128xbf16, #tpu.memory_space<vmem>>, vector<128x128xbf16>
    %cst_20 = arith.constant dense<0.000000e+00> : vector<8x128xf32>
    %39 = tpu.matmul %33, %38, %cst_20 {dimension_numbers = #tpu.dot_dimension_numbers<[1], [0], [0], [1], [0, 0, 1, 1], [], []>} : vector<8x128xbf16>, vector<128x128xbf16>, vector<8x128xf32> -> vector<8x128xf32>
    %40 = arith.addf %37, %39 : vector<8x128xf32>
    %41 = math.tanh %40 : vector<8x128xf32>
    %42 = arith.index_cast %35 : i32 to index
    %c0_21 = arith.constant 0 : index
    %43 = vector.load %arg6[%42, %c0_21] : memref<64x128xf32, #tpu.memory_space<vmem>>, vector<8x128xf32>
    tpu.vector_store %arg6[%42, %c0_21], %41 {strides = array<i32>} : memref<64x128xf32, #tpu.memory_space<vmem>>, vector<8x128xf32>,
    %44 = arith.truncf %41 : vector<8x128xf32> to vector<8x128xbf16>
    %c4_i32 = arith.constant 4 : i32
    %c8_i32_22 = arith.constant 8 : i32
    %45 = arith.muli %c4_i32, %c8_i32_22 : i32
    %46 = tpu.assume_multiple %45, 8 : i32
    %47 = arith.index_cast %46 : i32 to index
    %c0_23 = arith.constant 0 : index
    %48 = vector.load %arg0[%47, %c0_23] : memref<64x128xf32, #tpu.memory_space<vmem>>, vector<8x128xf32>
    %c0_24 = arith.constant 0 : index
    %c0_25 = arith.constant 0 : index
    %49 = vector.load %arg1[%c0_24, %c0_25] : memref<128x128xbf16, #tpu.memory_space<vmem>>, vector<128x128xbf16>
    %cst_26 = arith.constant dense<0.000000e+00> : vector<8x128xf32>
    %50 = tpu.matmul %44, %49, %cst_26 {dimension_numbers = #tpu.dot_dimension_numbers<[1], [0], [0], [1], [0, 0, 1, 1], [], []>} : vector<8x128xbf16>, vector<128x128xbf16>, vector<8x128xf32> -> vector<8x128xf32>
    %51 = arith.addf %48, %50 : vector<8x128xf32>
    %52 = math.tanh %51 : vector<8x128xf32>
    %53 = arith.index_cast %46 : i32 to index
    %c0_27 = arith.constant 0 : index
    %54 = vector.load %arg6[%53, %c0_27] : memref<64x128xf32, #tpu.memory_space<vmem>>, vector<8x128xf32>
    tpu.vector_store %arg6[%53, %c0_27], %52 {strides = array<i32>} : memref<64x128xf32, #tpu.memory_space<vmem>>, vector<8x128xf32>,
    %55 = arith.truncf %52 : vector<8x128xf32> to vector<8x128xbf16>
    %c5_i32 = arith.constant 5 : i32
    %c8_i32_28 = arith.constant 8 : i32
    %56 = arith.muli %c5_i32, %c8_i32_28 : i32
    %57 = tpu.assume_multiple %56, 8 : i32
    %58 = arith.index_cast %57 : i32 to index
    %c0_29 = arith.constant 0 : index
    %59 = vector.load %arg0[%58, %c0_29] : memref<64x128xf32, #tpu.memory_space<vmem>>, vector<8x128xf32>
    %c0_30 = arith.constant 0 : index
    %c0_31 = arith.constant 0 : index
    %60 = vector.load %arg1[%c0_30, %c0_31] : memref<128x128xbf16, #tpu.memory_space<vmem>>, vector<128x128xbf16>
    %cst_32 = arith.constant dense<0.000000e+00> : vector<8x128xf32>
    %61 = tpu.matmul %55, %60, %cst_32 {dimension_numbers = #tpu.dot_dimension_numbers<[1], [0], [0], [1], [0, 0, 1, 1], [], []>} : vector<8x128xbf16>, vector<128x128xbf16>, vector<8x128xf32> -> vector<8x128xf32>
    %62 = arith.addf %59, %61 : vector<8x128xf32>
    %63 = math.tanh %62 : vector<8x128xf32>
    %64 = arith.index_cast %57 : i32 to index
    %c0_33 = arith.constant 0 : index
    %65 = vector.load %arg6[%64, %c0_33] : memref<64x128xf32, #tpu.memory_space<vmem>>, vector<8x128xf32>
    tpu.vector_store %arg6[%64, %c0_33], %63 {strides = array<i32>} : memref<64x128xf32, #tpu.memory_space<vmem>>, vector<8x128xf32>,
    %66 = arith.truncf %63 : vector<8x128xf32> to vector<8x128xbf16>
    %c6_i32 = arith.constant 6 : i32
    %c8_i32_34 = arith.constant 8 : i32
    %67 = arith.muli %c6_i32, %c8_i32_34 : i32
    %68 = tpu.assume_multiple %67, 8 : i32
    %69 = arith.index_cast %68 : i32 to index
    %c0_35 = arith.constant 0 : index
    %70 = vector.load %arg0[%69, %c0_35] : memref<64x128xf32, #tpu.memory_space<vmem>>, vector<8x128xf32>
    %c0_36 = arith.constant 0 : index
    %c0_37 = arith.constant 0 : index
    %71 = vector.load %arg1[%c0_36, %c0_37] : memref<128x128xbf16, #tpu.memory_space<vmem>>, vector<128x128xbf16>
    %cst_38 = arith.constant dense<0.000000e+00> : vector<8x128xf32>
    %72 = tpu.matmul %66, %71, %cst_38 {dimension_numbers = #tpu.dot_dimension_numbers<[1], [0], [0], [1], [0, 0, 1, 1], [], []>} : vector<8x128xbf16>, vector<128x128xbf16>, vector<8x128xf32> -> vector<8x128xf32>
    %73 = arith.addf %70, %72 : vector<8x128xf32>
    %74 = math.tanh %73 : vector<8x128xf32>
    %75 = arith.index_cast %68 : i32 to index
    %c0_39 = arith.constant 0 : index
    %76 = vector.load %arg6[%75, %c0_39] : memref<64x128xf32, #tpu.memory_space<vmem>>, vector<8x128xf32>
    tpu.vector_store %arg6[%75, %c0_39], %74 {strides = array<i32>} : memref<64x128xf32, #tpu.memory_space<vmem>>, vector<8x128xf32>,
    %77 = arith.truncf %74 : vector<8x128xf32> to vector<8x128xbf16>
    %c7_i32 = arith.constant 7 : i32
    %c8_i32_40 = arith.constant 8 : i32
    %78 = arith.muli %c7_i32, %c8_i32_40 : i32
    %79 = tpu.assume_multiple %78, 8 : i32
    %80 = arith.index_cast %79 : i32 to index
    %c0_41 = arith.constant 0 : index
    %81 = vector.load %arg0[%80, %c0_41] : memref<64x128xf32, #tpu.memory_space<vmem>>, vector<8x128xf32>
    %c0_42 = arith.constant 0 : index
    %c0_43 = arith.constant 0 : index
    %82 = vector.load %arg1[%c0_42, %c0_43] : memref<128x128xbf16, #tpu.memory_space<vmem>>, vector<128x128xbf16>
    %cst_44 = arith.constant dense<0.000000e+00> : vector<8x128xf32>
    %83 = tpu.matmul %77, %82, %cst_44 {dimension_numbers = #tpu.dot_dimension_numbers<[1], [0], [0], [1], [0, 0, 1, 1], [], []>} : vector<8x128xbf16>, vector<128x128xbf16>, vector<8x128xf32> -> vector<8x128xf32>
    %84 = arith.addf %81, %83 : vector<8x128xf32>
    %85 = math.tanh %84 : vector<8x128xf32>
    %86 = arith.index_cast %79 : i32 to index
    %c0_45 = arith.constant 0 : index
    %87 = vector.load %arg6[%86, %c0_45] : memref<64x128xf32, #tpu.memory_space<vmem>>, vector<8x128xf32>
    tpu.vector_store %arg6[%86, %c0_45], %85 {strides = array<i32>} : memref<64x128xf32, #tpu.memory_space<vmem>>, vector<8x128xf32>,
    %88 = arith.truncf %85 : vector<8x128xf32> to vector<8x128xbf16>
    %c8_i32_46 = arith.constant 8 : i32
    %c0_47 = arith.constant 0 : index
    %c0_48 = arith.constant 0 : index
    %89 = vector.load %arg6[%c0_47, %c0_48] : memref<64x128xf32, #tpu.memory_space<vmem>>, vector<64x128xf32>
    %90 = arith.truncf %89 : vector<64x128xf32> to vector<64x128xbf16>
    %c0_49 = arith.constant 0 : index
    %c0_50 = arith.constant 0 : index
    %91 = vector.load %arg2[%c0_49, %c0_50] : memref<128x128xbf16, #tpu.memory_space<vmem>>, vector<128x128xbf16>
    %cst_51 = arith.constant dense<0.000000e+00> : vector<64x128xf32>
    %92 = tpu.matmul %90, %91, %cst_51 {dimension_numbers = #tpu.dot_dimension_numbers<[1], [0], [0], [1], [0, 0, 1, 1], [], []>} : vector<64x128xbf16>, vector<128x128xbf16>, vector<64x128xf32> -> vector<64x128xf32>
    %c0_52 = arith.constant 0 : index
    %c0_53 = arith.constant 0 : index
    %93 = vector.load %arg4[%c0_52, %c0_53] : memref<1x128xf32, #tpu.memory_space<vmem>>, vector<1x128xf32>
    %94 = vector.broadcast %93 : vector<1x128xf32> to vector<64x128xf32>
    %95 = arith.addf %92, %94 : vector<64x128xf32>
    %c0_54 = arith.constant 0 : index
    %c0_55 = arith.constant 0 : index
    %96 = vector.load %arg7[%c0_54, %c0_55] : memref<64x128xf32, #tpu.memory_space<vmem>>, vector<64x128xf32>
    tpu.vector_store %arg7[%c0_54, %c0_55], %95 {strides = array<i32>} : memref<64x128xf32, #tpu.memory_space<vmem>>, vector<64x128xf32>,
    %cst_56 = arith.constant 0.000000e+00 : f32
    %97 = vector.broadcast %cst_56 : f32 to vector<8x128xf32>
    %c0_i32_57 = arith.constant 0 : i32
    %c8_i32_58 = arith.constant 8 : i32
    %98 = arith.muli %c0_i32_57, %c8_i32_58 : i32
    %99 = tpu.assume_multiple %98, 8 : i32
    %100 = arith.index_cast %99 : i32 to index
    %c0_59 = arith.constant 0 : index
    %101 = vector.load %arg7[%100, %c0_59] : memref<64x128xf32, #tpu.memory_space<vmem>>, vector<8x128xf32>
    %102 = arith.truncf %97 : vector<8x128xf32> to vector<8x128xbf16>
    %c0_60 = arith.constant 0 : index
    %c0_61 = arith.constant 0 : index
    %103 = vector.load %arg3[%c0_60, %c0_61] : memref<128x128xbf16, #tpu.memory_space<vmem>>, vector<128x128xbf16>
    %cst_62 = arith.constant dense<0.000000e+00> : vector<8x128xf32>
    %104 = tpu.matmul %102, %103, %cst_62 {dimension_numbers = #tpu.dot_dimension_numbers<[1], [0], [0], [1], [0, 0, 1, 1], [], []>} : vector<8x128xbf16>, vector<128x128xbf16>, vector<8x128xf32> -> vector<8x128xf32>
    %105 = arith.addf %101, %104 : vector<8x128xf32>
    %106 = math.tanh %105 : vector<8x128xf32>
    %c1_i32_63 = arith.constant 1 : i32
    %c8_i32_64 = arith.constant 8 : i32
    %107 = arith.muli %c1_i32_63, %c8_i32_64 : i32
    %108 = tpu.assume_multiple %107, 8 : i32
    %109 = arith.index_cast %108 : i32 to index
    %c0_65 = arith.constant 0 : index
    %110 = vector.load %arg7[%109, %c0_65] : memref<64x128xf32, #tpu.memory_space<vmem>>, vector<8x128xf32>
    %111 = arith.truncf %106 : vector<8x128xf32> to vector<8x128xbf16>
    %c0_66 = arith.constant 0 : index
    %c0_67 = arith.constant 0 : index
    %112 = vector.load %arg3[%c0_66, %c0_67] : memref<128x128xbf16, #tpu.memory_space<vmem>>, vector<128x128xbf16>
    %cst_68 = arith.constant dense<0.000000e+00> : vector<8x128xf32>
    %113 = tpu.matmul %111, %112, %cst_68 {dimension_numbers = #tpu.dot_dimension_numbers<[1], [0], [0], [1], [0, 0, 1, 1], [], []>} : vector<8x128xbf16>, vector<128x128xbf16>, vector<8x128xf32> -> vector<8x128xf32>
    %114 = arith.addf %110, %113 : vector<8x128xf32>
    %115 = math.tanh %114 : vector<8x128xf32>
    %c2_i32_69 = arith.constant 2 : i32
    %c8_i32_70 = arith.constant 8 : i32
    %116 = arith.muli %c2_i32_69, %c8_i32_70 : i32
    %117 = tpu.assume_multiple %116, 8 : i32
    %118 = arith.index_cast %117 : i32 to index
    %c0_71 = arith.constant 0 : index
    %119 = vector.load %arg7[%118, %c0_71] : memref<64x128xf32, #tpu.memory_space<vmem>>, vector<8x128xf32>
    %120 = arith.truncf %115 : vector<8x128xf32> to vector<8x128xbf16>
    %c0_72 = arith.constant 0 : index
    %c0_73 = arith.constant 0 : index
    %121 = vector.load %arg3[%c0_72, %c0_73] : memref<128x128xbf16, #tpu.memory_space<vmem>>, vector<128x128xbf16>
    %cst_74 = arith.constant dense<0.000000e+00> : vector<8x128xf32>
    %122 = tpu.matmul %120, %121, %cst_74 {dimension_numbers = #tpu.dot_dimension_numbers<[1], [0], [0], [1], [0, 0, 1, 1], [], []>} : vector<8x128xbf16>, vector<128x128xbf16>, vector<8x128xf32> -> vector<8x128xf32>
    %123 = arith.addf %119, %122 : vector<8x128xf32>
    %124 = math.tanh %123 : vector<8x128xf32>
    %c3_i32_75 = arith.constant 3 : i32
    %c8_i32_76 = arith.constant 8 : i32
    %125 = arith.muli %c3_i32_75, %c8_i32_76 : i32
    %126 = tpu.assume_multiple %125, 8 : i32
    %127 = arith.index_cast %126 : i32 to index
    %c0_77 = arith.constant 0 : index
    %128 = vector.load %arg7[%127, %c0_77] : memref<64x128xf32, #tpu.memory_space<vmem>>, vector<8x128xf32>
    %129 = arith.truncf %124 : vector<8x128xf32> to vector<8x128xbf16>
    %c0_78 = arith.constant 0 : index
    %c0_79 = arith.constant 0 : index
    %130 = vector.load %arg3[%c0_78, %c0_79] : memref<128x128xbf16, #tpu.memory_space<vmem>>, vector<128x128xbf16>
    %cst_80 = arith.constant dense<0.000000e+00> : vector<8x128xf32>
    %131 = tpu.matmul %129, %130, %cst_80 {dimension_numbers = #tpu.dot_dimension_numbers<[1], [0], [0], [1], [0, 0, 1, 1], [], []>} : vector<8x128xbf16>, vector<128x128xbf16>, vector<8x128xf32> -> vector<8x128xf32>
    %132 = arith.addf %128, %131 : vector<8x128xf32>
    %133 = math.tanh %132 : vector<8x128xf32>
    %c4_i32_81 = arith.constant 4 : i32
    %c8_i32_82 = arith.constant 8 : i32
    %134 = arith.muli %c4_i32_81, %c8_i32_82 : i32
    %135 = tpu.assume_multiple %134, 8 : i32
    %136 = arith.index_cast %135 : i32 to index
    %c0_83 = arith.constant 0 : index
    %137 = vector.load %arg7[%136, %c0_83] : memref<64x128xf32, #tpu.memory_space<vmem>>, vector<8x128xf32>
    %138 = arith.truncf %133 : vector<8x128xf32> to vector<8x128xbf16>
    %c0_84 = arith.constant 0 : index
    %c0_85 = arith.constant 0 : index
    %139 = vector.load %arg3[%c0_84, %c0_85] : memref<128x128xbf16, #tpu.memory_space<vmem>>, vector<128x128xbf16>
    %cst_86 = arith.constant dense<0.000000e+00> : vector<8x128xf32>
    %140 = tpu.matmul %138, %139, %cst_86 {dimension_numbers = #tpu.dot_dimension_numbers<[1], [0], [0], [1], [0, 0, 1, 1], [], []>} : vector<8x128xbf16>, vector<128x128xbf16>, vector<8x128xf32> -> vector<8x128xf32>
    %141 = arith.addf %137, %140 : vector<8x128xf32>
    %142 = math.tanh %141 : vector<8x128xf32>
    %c5_i32_87 = arith.constant 5 : i32
    %c8_i32_88 = arith.constant 8 : i32
    %143 = arith.muli %c5_i32_87, %c8_i32_88 : i32
    %144 = tpu.assume_multiple %143, 8 : i32
    %145 = arith.index_cast %144 : i32 to index
    %c0_89 = arith.constant 0 : index
    %146 = vector.load %arg7[%145, %c0_89] : memref<64x128xf32, #tpu.memory_space<vmem>>, vector<8x128xf32>
    %147 = arith.truncf %142 : vector<8x128xf32> to vector<8x128xbf16>
    %c0_90 = arith.constant 0 : index
    %c0_91 = arith.constant 0 : index
    %148 = vector.load %arg3[%c0_90, %c0_91] : memref<128x128xbf16, #tpu.memory_space<vmem>>, vector<128x128xbf16>
    %cst_92 = arith.constant dense<0.000000e+00> : vector<8x128xf32>
    %149 = tpu.matmul %147, %148, %cst_92 {dimension_numbers = #tpu.dot_dimension_numbers<[1], [0], [0], [1], [0, 0, 1, 1], [], []>} : vector<8x128xbf16>, vector<128x128xbf16>, vector<8x128xf32> -> vector<8x128xf32>
    %150 = arith.addf %146, %149 : vector<8x128xf32>
    %151 = math.tanh %150 : vector<8x128xf32>
    %c6_i32_93 = arith.constant 6 : i32
    %c8_i32_94 = arith.constant 8 : i32
    %152 = arith.muli %c6_i32_93, %c8_i32_94 : i32
    %153 = tpu.assume_multiple %152, 8 : i32
    %154 = arith.index_cast %153 : i32 to index
    %c0_95 = arith.constant 0 : index
    %155 = vector.load %arg7[%154, %c0_95] : memref<64x128xf32, #tpu.memory_space<vmem>>, vector<8x128xf32>
    %156 = arith.truncf %151 : vector<8x128xf32> to vector<8x128xbf16>
    %c0_96 = arith.constant 0 : index
    %c0_97 = arith.constant 0 : index
    %157 = vector.load %arg3[%c0_96, %c0_97] : memref<128x128xbf16, #tpu.memory_space<vmem>>, vector<128x128xbf16>
    %cst_98 = arith.constant dense<0.000000e+00> : vector<8x128xf32>
    %158 = tpu.matmul %156, %157, %cst_98 {dimension_numbers = #tpu.dot_dimension_numbers<[1], [0], [0], [1], [0, 0, 1, 1], [], []>} : vector<8x128xbf16>, vector<128x128xbf16>, vector<8x128xf32> -> vector<8x128xf32>
    %159 = arith.addf %155, %158 : vector<8x128xf32>
    %160 = math.tanh %159 : vector<8x128xf32>
    %c7_i32_99 = arith.constant 7 : i32
    %c8_i32_100 = arith.constant 8 : i32
    %161 = arith.muli %c7_i32_99, %c8_i32_100 : i32
    %162 = tpu.assume_multiple %161, 8 : i32
    %163 = arith.index_cast %162 : i32 to index
    %c0_101 = arith.constant 0 : index
    %164 = vector.load %arg7[%163, %c0_101] : memref<64x128xf32, #tpu.memory_space<vmem>>, vector<8x128xf32>
    %165 = arith.truncf %160 : vector<8x128xf32> to vector<8x128xbf16>
    %c0_102 = arith.constant 0 : index
    %c0_103 = arith.constant 0 : index
    %166 = vector.load %arg3[%c0_102, %c0_103] : memref<128x128xbf16, #tpu.memory_space<vmem>>, vector<128x128xbf16>
    %cst_104 = arith.constant dense<0.000000e+00> : vector<8x128xf32>
    %167 = tpu.matmul %165, %166, %cst_104 {dimension_numbers = #tpu.dot_dimension_numbers<[1], [0], [0], [1], [0, 0, 1, 1], [], []>} : vector<8x128xbf16>, vector<128x128xbf16>, vector<8x128xf32> -> vector<8x128xf32>
    %168 = arith.addf %164, %167 : vector<8x128xf32>
    %169 = math.tanh %168 : vector<8x128xf32>
    %c8_i32_105 = arith.constant 8 : i32
    %c0_106 = arith.constant 0 : index
    %c0_107 = arith.constant 0 : index
    %170 = vector.load %arg5[%c0_106, %c0_107] : memref<8x128xf32, #tpu.memory_space<vmem>>, vector<8x128xf32>
    tpu.vector_store %arg5[%c0_106, %c0_107], %169 {strides = array<i32>} : memref<8x128xf32, #tpu.memory_space<vmem>>, vector<8x128xf32>,
    return
  }
}

</mosaic_0001>

<llo_original>
// kernel: rnn_model_forward.1
$region0: #{rnn_model_forward.1}
  #allocation0 [shape = 'u32[]', space=smem, size = 0x4, offset = 0x4, fixed_abs, tag = 'smem constant byte address 0x4 - core index']
  #allocation1 [shape = 'u32[144,128]{1,0:T(1,128)}', space=vmem, size = 0x12000, scoped, tag = 'internal scratch']
  #allocation2 [shape = 'f32[64,128]{1,0:T(8,128)}', space=vmem, size = 0x8000, scoped, tag = 'scratch operand']
  #allocation3 [shape = 'f32[64,128]{1,0:T(8,128)}', space=vmem, size = 0x8000, scoped, tag = 'scratch operand']
  %s0 = inlined_call_operand.vmem [shape: f32[64,128], index: 0, kind: input, shape index: {}]
  %s1 = inlined_call_operand.vmem [shape: bf16[128,128], index: 1, kind: input, shape index: {}]
  %s2 = inlined_call_operand.vmem [shape: bf16[128,128], index: 2, kind: input, shape index: {}]
  %s3 = inlined_call_operand.vmem [shape: bf16[128,128], index: 3, kind: input, shape index: {}]
  %s4 = inlined_call_operand.vmem [shape: f32[1,128], index: 4, kind: input, shape index: {}]
  %s5 = inlined_call_operand.vmem [shape: f32[8,128], index: 5, kind: output, shape index: {}]
  %s6 = sld [smem:[#allocation0]]
  $region30: #{rnn_model_forward.1} parent=0
    _
  %s8 = ssub.s32 1, %s6
  %s9 = scalar_select 0, %s8, %s6
  // Predicated region
  $region2: #{rnn_model_forward.1} parent=0 // pred_check
    _
  $region3: #{rnn_model_forward.1} parent=0 // pred_check_branch
    %11 = sbr.rel (0) target = $region5
  $region4: #{rnn_model_forward.1} parent=0 // pred_region
    _
  $region5: #{rnn_model_forward.1} parent=0 // pred_fallthru
    _
  // Predicated region
  $region6: #{rnn_model_forward.1} parent=0 // pred_check
    _
  $region7: #{rnn_model_forward.1} parent=0 // pred_check_branch
    %13 = sbr.rel (0) target = $region9
  $region8: #{rnn_model_forward.1} parent=0 // pred_region
    _
  $region9: #{rnn_model_forward.1} parent=0 // pred_fallthru
    _
  // Predicated region
  $region10: #{rnn_model_forward.1} parent=0 // pred_check
    _
  $region11: #{rnn_model_forward.1} parent=0 // pred_check_branch
    %15 = sbr.rel (0) target = $region13
  $region12: #{rnn_model_forward.1} parent=0 // pred_region
    _
  $region13: #{rnn_model_forward.1} parent=0 // pred_fallthru
    _
  // Predicated region
  $region14: #{rnn_model_forward.1} parent=0 // pred_check
    _
  $region15: #{rnn_model_forward.1} parent=0 // pred_check_branch
    %17 = sbr.rel (0) target = $region17
  $region16: #{rnn_model_forward.1} parent=0 // pred_region
    _
  $region17: #{rnn_model_forward.1} parent=0 // pred_fallthru
    _
  // Predicated region
  $region18: #{rnn_model_forward.1} parent=0 // pred_check
    _
  $region19: #{rnn_model_forward.1} parent=0 // pred_check_branch
    %19 = sbr.rel (0) target = $region21
  $region20: #{rnn_model_forward.1} parent=0 // pred_region
    _
  $region21: #{rnn_model_forward.1} parent=0 // pred_fallthru
    _
  %v21 = vld [vmem:[%s0] sm:$0xff]
  %v22 = vld [vmem:[%s1] sm:$0xf]
  %v23 = vld [vmem:[%s1 + $0x4] sm:$0xf]
  %v24 = vld [vmem:[%s1 + $0x8] sm:$0xf]
  %v25 = vld [vmem:[%s1 + $0xc] sm:$0xf]
  %v26 = vld [vmem:[%s1 + $0x10] sm:$0xf]
  %v27 = vld [vmem:[%s1 + $0x14] sm:$0xf]
  %v28 = vld [vmem:[%s1 + $0x18] sm:$0xf]
  %v29 = vld [vmem:[%s1 + $0x1c] sm:$0xf]
  %v30 = vld [vmem:[%s1 + $0x20] sm:$0xf]
  %v31 = vld [vmem:[%s1 + $0x24] sm:$0xf]
  %v32 = vld [vmem:[%s1 + $0x28] sm:$0xf]
  %v33 = vld [vmem:[%s1 + $0x2c] sm:$0xf]
  %v34 = vld [vmem:[%s1 + $0x30] sm:$0xf]
  %v35 = vld [vmem:[%s1 + $0x34] sm:$0xf]
  %v36 = vld [vmem:[%s1 + $0x38] sm:$0xf]
  %v37 = vld [vmem:[%s1 + $0x3c] sm:$0xf]
  %v54 = vunpack.c.l.b16 %v22
  %v55 = vunpack.c.l.b16 %v23
  %v56 = vunpack.c.l.b16 %v24
  %v57 = vunpack.c.l.b16 %v25
  %v58 = vunpack.c.l.b16 %v26
  %v59 = vunpack.c.l.b16 %v27
  %v60 = vunpack.c.l.b16 %v28
  %v61 = vunpack.c.l.b16 %v29
  %v62 = vunpack.c.l.b16 %v30
  %v63 = vunpack.c.l.b16 %v31
  %v64 = vunpack.c.l.b16 %v32
  %v65 = vunpack.c.l.b16 %v33
  %v66 = vunpack.c.l.b16 %v34
  %v67 = vunpack.c.l.b16 %v35
  %v68 = vunpack.c.l.b16 %v36
  %v69 = vunpack.c.l.b16 %v37
  %v70 = vpack.c.b16 %v55, %v54
  %v71 = vpack.c.b16 %v57, %v56
  %v72 = vpack.c.b16 %v59, %v58
  %v73 = vpack.c.b16 %v61, %v60
  %v74 = vpack.c.b16 %v63, %v62
  %v75 = vpack.c.b16 %v65, %v64
  %v76 = vpack.c.b16 %v67, %v66
  %v77 = vpack.c.b16 %v69, %v68
  %86 = vmatprep.subr.bf16.mxu0 0
  %87 = vmatpush1.bf16.msra.mxu0 %v70
  %88 = vmatprep.subr.bf16.mxu0 0
  %89 = vmatpush1.bf16.msra.mxu0 %v71
  %90 = vmatprep.subr.bf16.mxu0 0
  %91 = vmatpush1.bf16.msra.mxu0 %v72
  %92 = vmatprep.subr.bf16.mxu0 0
  %93 = vmatpush1.bf16.msra.mxu0 %v73
  %94 = vmatprep.subr.bf16.mxu0 0
  %95 = vmatpush1.bf16.msra.mxu0 %v74
  %96 = vmatprep.subr.bf16.mxu0 0
  %97 = vmatpush1.bf16.msra.mxu0 %v75
  %98 = vmatprep.subr.bf16.mxu0 0
  %99 = vmatpush1.bf16.msra.mxu0 %v76
  %100 = vmatprep.subr.bf16.mxu0 0
  %101 = vmatpush1.bf16.msra.mxu0 %v77
  %102 = vmatprep.subr.bf16.mxu0 0
  %103 = vmatpush1.bf16.msra.mxu0 0
  %104 = vmatprep.subr.bf16.mxu0 0
  %105 = vmatpush1.bf16.msra.mxu0 0
  %106 = vmatprep.subr.bf16.mxu0 0
  %107 = vmatpush1.bf16.msra.mxu0 0
  %108 = vmatprep.subr.bf16.mxu0 0
  %109 = vmatpush1.bf16.msra.mxu0 0
  %110 = vmatprep.subr.bf16.mxu0 0
  %111 = vmatpush1.bf16.msra.mxu0 0
  %112 = vmatprep.subr.bf16.mxu0 0
  %113 = vmatpush1.bf16.msra.mxu0 0
  %114 = vmatprep.subr.bf16.mxu0 0
  %115 = vmatpush1.bf16.msra.mxu0 0
  %116 = vmatprep.subr.bf16.mxu0 0
  %117 = vmatpush1.bf16.msra.mxu0 0
  %118 = vmatprep.mubr.bf16.mxu0 0
  %119 = vmatmul.mubr.bf16.gmra.mrb[0].mxu0 0
  %v120 = vpop.f32.mrb[0].mxu0
  %v121 = vadd.f32 0.0, %v120
  %v122 = vpop.f32.mrb[0].mxu0
  %v123 = vpop.f32.mrb[0].mxu0
  %v124 = vpop.f32.mrb[0].mxu0
  %125 = vdwg.mxu0
  %v126 = vadd.f32 %v21, %v121
  %v127 = vtanh.pop %v126
  %128 = vst [vmem:[#allocation2] sm:$0xff] %v127
  %v129 = vpack.c.bf16 %v127, %v127
  %s130 = scalar_lea.vmem %s0, 8
  %v131 = vld [vmem:[%s130] sm:$0xff]
  %v132 = vld [vmem:[%s1] sm:$0xf]
  %v133 = vld [vmem:[%s1 + $0x4] sm:$0xf]
  %v134 = vld [vmem:[%s1 + $0x8] sm:$0xf]
  %v135 = vld [vmem:[%s1 + $0xc] sm:$0xf]
  %v136 = vld [vmem:[%s1 + $0x10] sm:$0xf]
  %v137 = vld [vmem:[%s1 + $0x14] sm:$0xf]
  %v138 = vld [vmem:[%s1 + $0x18] sm:$0xf]
  %v139 = vld [vmem:[%s1 + $0x1c] sm:$0xf]
  %v140 = vld [vmem:[%s1 + $0x20] sm:$0xf]
  %v141 = vld [vmem:[%s1 + $0x24] sm:$0xf]
  %v142 = vld [vmem:[%s1 + $0x28] sm:$0xf]
  %v143 = vld [vmem:[%s1 + $0x2c] sm:$0xf]
  %v144 = vld [vmem:[%s1 + $0x30] sm:$0xf]
  %v145 = vld [vmem:[%s1 + $0x34] sm:$0xf]
  %v146 = vld [vmem:[%s1 + $0x38] sm:$0xf]
  %v147 = vld [vmem:[%s1 + $0x3c] sm:$0xf]
  %v164 = vunpack.c.l.b16 %v132
  %v165 = vunpack.c.l.b16 %v133
  %v166 = vunpack.c.l.b16 %v134
  %v167 = vunpack.c.l.b16 %v135
  %v168 = vunpack.c.l.b16 %v136
  %v169 = vunpack.c.l.b16 %v137
  %v170 = vunpack.c.l.b16 %v138
  %v171 = vunpack.c.l.b16 %v139
  %v172 = vunpack.c.l.b16 %v140
  %v173 = vunpack.c.l.b16 %v141
  %v174 = vunpack.c.l.b16 %v142
  %v175 = vunpack.c.l.b16 %v143
  %v176 = vunpack.c.l.b16 %v144
  %v177 = vunpack.c.l.b16 %v145
  %v178 = vunpack.c.l.b16 %v146
  %v179 = vunpack.c.l.b16 %v147
  %v180 = vpack.c.b16 %v165, %v164
  %v181 = vpack.c.b16 %v167, %v166
  %v182 = vpack.c.b16 %v169, %v168
  %v183 = vpack.c.b16 %v171, %v170
  %v184 = vpack.c.b16 %v173, %v172
  %v185 = vpack.c.b16 %v175, %v174
  %v186 = vpack.c.b16 %v177, %v176
  %v187 = vpack.c.b16 %v179, %v178
  %196 = vmatprep.subr.bf16.mxu0 0
  %197 = vmatpush1.bf16.msra.mxu0 %v180
  %198 = vmatprep.subr.bf16.mxu0 0
  %199 = vmatpush1.bf16.msra.mxu0 %v181
  %200 = vmatprep.subr.bf16.mxu0 0
  %201 = vmatpush1.bf16.msra.mxu0 %v182
  %202 = vmatprep.subr.bf16.mxu0 0
  %203 = vmatpush1.bf16.msra.mxu0 %v183
  %204 = vmatprep.subr.bf16.mxu0 0
  %205 = vmatpush1.bf16.msra.mxu0 %v184
  %206 = vmatprep.subr.bf16.mxu0 0
  %207 = vmatpush1.bf16.msra.mxu0 %v185
  %208 = vmatprep.subr.bf16.mxu0 0
  %209 = vmatpush1.bf16.msra.mxu0 %v186
  %210 = vmatprep.subr.bf16.mxu0 0
  %211 = vmatpush1.bf16.msra.mxu0 %v187
  %212 = vmatprep.subr.bf16.mxu0 0
  %213 = vmatpush1.bf16.msra.mxu0 0
  %214 = vmatprep.subr.bf16.mxu0 0
  %215 = vmatpush1.bf16.msra.mxu0 0
  %216 = vmatprep.subr.bf16.mxu0 0
  %217 = vmatpush1.bf16.msra.mxu0 0
  %218 = vmatprep.subr.bf16.mxu0 0
  %219 = vmatpush1.bf16.msra.mxu0 0
  %220 = vmatprep.subr.bf16.mxu0 0
  %221 = vmatpush1.bf16.msra.mxu0 0
  %222 = vmatprep.subr.bf16.mxu0 0
  %223 = vmatpush1.bf16.msra.mxu0 0
  %224 = vmatprep.subr.bf16.mxu0 0
  %225 = vmatpush1.bf16.msra.mxu0 0
  %226 = vmatprep.subr.bf16.mxu0 0
  %227 = vmatpush1.bf16.msra.mxu0 0
  %228 = vmatprep.mubr.bf16.mxu0 0
  %229 = vmatmul.mubr.bf16.gmra.mrb[0].mxu0 %v129
  %v230 = vpop.f32.mrb[0].mxu0
  %v231 = vadd.f32 0.0, %v230
  %v232 = vpop.f32.mrb[0].mxu0
  %v233 = vpop.f32.mrb[0].mxu0
  %v234 = vpop.f32.mrb[0].mxu0
  %235 = vdwg.mxu0
  %v236 = vadd.f32 %v131, %v231
  %v237 = vtanh.pop %v236
  %s238 = scalar_lea.vmem [#allocation2], 8
  %239 = vst [vmem:[%s238] sm:$0xff] %v237
  %v240 = vpack.c.bf16 %v237, %v237
  %s241 = scalar_lea.vmem %s0, 16
  %v242 = vld [vmem:[%s241] sm:$0xff]
  %v243 = vld [vmem:[%s1] sm:$0xf]
  %v244 = vld [vmem:[%s1 + $0x4] sm:$0xf]
  %v245 = vld [vmem:[%s1 + $0x8] sm:$0xf]
  %v246 = vld [vmem:[%s1 + $0xc] sm:$0xf]
  %v247 = vld [vmem:[%s1 + $0x10] sm:$0xf]
  %v248 = vld [vmem:[%s1 + $0x14] sm:$0xf]
  %v249 = vld [vmem:[%s1 + $0x18] sm:$0xf]
  %v250 = vld [vmem:[%s1 + $0x1c] sm:$0xf]
  %v251 = vld [vmem:[%s1 + $0x20] sm:$0xf]
  %v252 = vld [vmem:[%s1 + $0x24] sm:$0xf]
  %v253 = vld [vmem:[%s1 + $0x28] sm:$0xf]
  %v254 = vld [vmem:[%s1 + $0x2c] sm:$0xf]
  %v255 = vld [vmem:[%s1 + $0x30] sm:$0xf]
  %v256 = vld [vmem:[%s1 + $0x34] sm:$0xf]
  %v257 = vld [vmem:[%s1 + $0x38] sm:$0xf]
  %v258 = vld [vmem:[%s1 + $0x3c] sm:$0xf]
  %v275 = vunpack.c.l.b16 %v243
  %v276 = vunpack.c.l.b16 %v244
  %v277 = vunpack.c.l.b16 %v245
  %v278 = vunpack.c.l.b16 %v246
  %v279 = vunpack.c.l.b16 %v247
  %v280 = vunpack.c.l.b16 %v248
  %v281 = vunpack.c.l.b16 %v249
  %v282 = vunpack.c.l.b16 %v250
  %v283 = vunpack.c.l.b16 %v251
  %v284 = vunpack.c.l.b16 %v252
  %v285 = vunpack.c.l.b16 %v253
  %v286 = vunpack.c.l.b16 %v254
  %v287 = vunpack.c.l.b16 %v255
  %v288 = vunpack.c.l.b16 %v256
  %v289 = vunpack.c.l.b16 %v257
  %v290 = vunpack.c.l.b16 %v258
  %v291 = vpack.c.b16 %v276, %v275
  %v292 = vpack.c.b16 %v278, %v277
  %v293 = vpack.c.b16 %v280, %v279
  %v294 = vpack.c.b16 %v282, %v281
  %v295 = vpack.c.b16 %v284, %v283
  %v296 = vpack.c.b16 %v286, %v285
  %v297 = vpack.c.b16 %v288, %v287
  %v298 = vpack.c.b16 %v290, %v289
  %307 = vmatprep.subr.bf16.mxu0 0
  %308 = vmatpush1.bf16.msra.mxu0 %v291
  %309 = vmatprep.subr.bf16.mxu0 0
  %310 = vmatpush1.bf16.msra.mxu0 %v292
  %311 = vmatprep.subr.bf16.mxu0 0
  %312 = vmatpush1.bf16.msra.mxu0 %v293
  %313 = vmatprep.subr.bf16.mxu0 0
  %314 = vmatpush1.bf16.msra.mxu0 %v294
  %315 = vmatprep.subr.bf16.mxu0 0
  %316 = vmatpush1.bf16.msra.mxu0 %v295
  %317 = vmatprep.subr.bf16.mxu0 0
  %318 = vmatpush1.bf16.msra.mxu0 %v296
  %319 = vmatprep.subr.bf16.mxu0 0
  %320 = vmatpush1.bf16.msra.mxu0 %v297
  %321 = vmatprep.subr.bf16.mxu0 0
  %322 = vmatpush1.bf16.msra.mxu0 %v298
  %323 = vmatprep.subr.bf16.mxu0 0
  %324 = vmatpush1.bf16.msra.mxu0 0
  %325 = vmatprep.subr.bf16.mxu0 0
  %326 = vmatpush1.bf16.msra.mxu0 0
  %327 = vmatprep.subr.bf16.mxu0 0
  %328 = vmatpush1.bf16.msra.mxu0 0
  %329 = vmatprep.subr.bf16.mxu0 0
  %330 = vmatpush1.bf16.msra.mxu0 0
  %331 = vmatprep.subr.bf16.mxu0 0
  %332 = vmatpush1.bf16.msra.mxu0 0
  %333 = vmatprep.subr.bf16.mxu0 0
  %334 = vmatpush1.bf16.msra.mxu0 0
  %335 = vmatprep.subr.bf16.mxu0 0
  %336 = vmatpush1.bf16.msra.mxu0 0
  %337 = vmatprep.subr.bf16.mxu0 0
  %338 = vmatpush1.bf16.msra.mxu0 0
  %339 = vmatprep.mubr.bf16.mxu0 0
  %340 = vmatmul.mubr.bf16.gmra.mrb[0].mxu0 %v240
  %v341 = vpop.f32.mrb[0].mxu0
  %v342 = vadd.f32 0.0, %v341
  %v343 = vpop.f32.mrb[0].mxu0
  %v344 = vpop.f32.mrb[0].mxu0
  %v345 = vpop.f32.mrb[0].mxu0
  %346 = vdwg.mxu0
  %v347 = vadd.f32 %v242, %v342
  %v348 = vtanh.pop %v347
  %s349 = scalar_lea.vmem [#allocation2], 16
  %350 = vst [vmem:[%s349] sm:$0xff] %v348
  %v351 = vpack.c.bf16 %v348, %v348
  %s352 = scalar_lea.vmem %s0, 24
  %v353 = vld [vmem:[%s352] sm:$0xff]
  %v354 = vld [vmem:[%s1] sm:$0xf]
  %v355 = vld [vmem:[%s1 + $0x4] sm:$0xf]
  %v356 = vld [vmem:[%s1 + $0x8] sm:$0xf]
  %v357 = vld [vmem:[%s1 + $0xc] sm:$0xf]
  %v358 = vld [vmem:[%s1 + $0x10] sm:$0xf]
  %v359 = vld [vmem:[%s1 + $0x14] sm:$0xf]
  %v360 = vld [vmem:[%s1 + $0x18] sm:$0xf]
  %v361 = vld [vmem:[%s1 + $0x1c] sm:$0xf]
  %v362 = vld [vmem:[%s1 + $0x20] sm:$0xf]
  %v363 = vld [vmem:[%s1 + $0x24] sm:$0xf]
  %v364 = vld [vmem:[%s1 + $0x28] sm:$0xf]
  %v365 = vld [vmem:[%s1 + $0x2c] sm:$0xf]
  %v366 = vld [vmem:[%s1 + $0x30] sm:$0xf]
  %v367 = vld [vmem:[%s1 + $0x34] sm:$0xf]
  %v368 = vld [vmem:[%s1 + $0x38] sm:$0xf]
  %v369 = vld [vmem:[%s1 + $0x3c] sm:$0xf]
  %v386 = vunpack.c.l.b16 %v354
  %v387 = vunpack.c.l.b16 %v355
  %v388 = vunpack.c.l.b16 %v356
  %v389 = vunpack.c.l.b16 %v357
  %v390 = vunpack.c.l.b16 %v358
  %v391 = vunpack.c.l.b16 %v359
  %v392 = vunpack.c.l.b16 %v360
  %v393 = vunpack.c.l.b16 %v361
  %v394 = vunpack.c.l.b16 %v362
  %v395 = vunpack.c.l.b16 %v363
  %v396 = vunpack.c.l.b16 %v364
  %v397 = vunpack.c.l.b16 %v365
  %v398 = vunpack.c.l.b16 %v366
  %v399 = vunpack.c.l.b16 %v367
  %v400 = vunpack.c.l.b16 %v368
  %v401 = vunpack.c.l.b16 %v369
  %v402 = vpack.c.b16 %v387, %v386
  %v403 = vpack.c.b16 %v389, %v388
  %v404 = vpack.c.b16 %v391, %v390
  %v405 = vpack.c.b16 %v393, %v392
  %v406 = vpack.c.b16 %v395, %v394
  %v407 = vpack.c.b16 %v397, %v396
  %v408 = vpack.c.b16 %v399, %v398
  %v409 = vpack.c.b16 %v401, %v400
  %418 = vmatprep.subr.bf16.mxu0 0
  %419 = vmatpush1.bf16.msra.mxu0 %v402
  %420 = vmatprep.subr.bf16.mxu0 0
  %421 = vmatpush1.bf16.msra.mxu0 %v403
  %422 = vmatprep.subr.bf16.mxu0 0
  %423 = vmatpush1.bf16.msra.mxu0 %v404
  %424 = vmatprep.subr.bf16.mxu0 0
  %425 = vmatpush1.bf16.msra.mxu0 %v405
  %426 = vmatprep.subr.bf16.mxu0 0
  %427 = vmatpush1.bf16.msra.mxu0 %v406
  %428 = vmatprep.subr.bf16.mxu0 0
  %429 = vmatpush1.bf16.msra.mxu0 %v407
  %430 = vmatprep.subr.bf16.mxu0 0
  %431 = vmatpush1.bf16.msra.mxu0 %v408
  %432 = vmatprep.subr.bf16.mxu0 0
  %433 = vmatpush1.bf16.msra.mxu0 %v409
  %434 = vmatprep.subr.bf16.mxu0 0
  %435 = vmatpush1.bf16.msra.mxu0 0
  %436 = vmatprep.subr.bf16.mxu0 0
  %437 = vmatpush1.bf16.msra.mxu0 0
  %438 = vmatprep.subr.bf16.mxu0 0
  %439 = vmatpush1.bf16.msra.mxu0 0
  %440 = vmatprep.subr.bf16.mxu0 0
  %441 = vmatpush1.bf16.msra.mxu0 0
  %442 = vmatprep.subr.bf16.mxu0 0
  %443 = vmatpush1.bf16.msra.mxu0 0
  %444 = vmatprep.subr.bf16.mxu0 0
  %445 = vmatpush1.bf16.msra.mxu0 0
  %446 = vmatprep.subr.bf16.mxu0 0
  %447 = vmatpush1.bf16.msra.mxu0 0
  %448 = vmatprep.subr.bf16.mxu0 0
  %449 = vmatpush1.bf16.msra.mxu0 0
  %450 = vmatprep.mubr.bf16.mxu0 0
  %451 = vmatmul.mubr.bf16.gmra.mrb[0].mxu0 %v351
  %v452 = vpop.f32.mrb[0].mxu0
  %v453 = vadd.f32 0.0, %v452
  %v454 = vpop.f32.mrb[0].mxu0
  %v455 = vpop.f32.mrb[0].mxu0
  %v456 = vpop.f32.mrb[0].mxu0
  %457 = vdwg.mxu0
  %v458 = vadd.f32 %v353, %v453
  %v459 = vtanh.pop %v458
  %s460 = scalar_lea.vmem [#allocation2], 24
  %461 = vst [vmem:[%s460] sm:$0xff] %v459
  %v462 = vpack.c.bf16 %v459, %v459
  %s463 = scalar_lea.vmem %s0, 32
  %v464 = vld [vmem:[%s463] sm:$0xff]
  %v465 = vld [vmem:[%s1] sm:$0xf]
  %v466 = vld [vmem:[%s1 + $0x4] sm:$0xf]
  %v467 = vld [vmem:[%s1 + $0x8] sm:$0xf]
  %v468 = vld [vmem:[%s1 + $0xc] sm:$0xf]
  %v469 = vld [vmem:[%s1 + $0x10] sm:$0xf]
  %v470 = vld [vmem:[%s1 + $0x14] sm:$0xf]
  %v471 = vld [vmem:[%s1 + $0x18] sm:$0xf]
  %v472 = vld [vmem:[%s1 + $0x1c] sm:$0xf]
  %v473 = vld [vmem:[%s1 + $0x20] sm:$0xf]
  %v474 = vld [vmem:[%s1 + $0x24] sm:$0xf]
  %v475 = vld [vmem:[%s1 + $0x28] sm:$0xf]
  %v476 = vld [vmem:[%s1 + $0x2c] sm:$0xf]
  %v477 = vld [vmem:[%s1 + $0x30] sm:$0xf]
  %v478 = vld [vmem:[%s1 + $0x34] sm:$0xf]
  %v479 = vld [vmem:[%s1 + $0x38] sm:$0xf]
  %v480 = vld [vmem:[%s1 + $0x3c] sm:$0xf]
  %v497 = vunpack.c.l.b16 %v465
  %v498 = vunpack.c.l.b16 %v466
  %v499 = vunpack.c.l.b16 %v467
  %v500 = vunpack.c.l.b16 %v468
  %v501 = vunpack.c.l.b16 %v469
  %v502 = vunpack.c.l.b16 %v470
  %v503 = vunpack.c.l.b16 %v471
  %v504 = vunpack.c.l.b16 %v472
  %v505 = vunpack.c.l.b16 %v473
  %v506 = vunpack.c.l.b16 %v474
  %v507 = vunpack.c.l.b16 %v475
  %v508 = vunpack.c.l.b16 %v476
  %v509 = vunpack.c.l.b16 %v477
  %v510 = vunpack.c.l.b16 %v478
  %v511 = vunpack.c.l.b16 %v479
  %v512 = vunpack.c.l.b16 %v480
  %v513 = vpack.c.b16 %v498, %v497
  %v514 = vpack.c.b16 %v500, %v499
  %v515 = vpack.c.b16 %v502, %v501
  %v516 = vpack.c.b16 %v504, %v503
  %v517 = vpack.c.b16 %v506, %v505
  %v518 = vpack.c.b16 %v508, %v507
  %v519 = vpack.c.b16 %v510, %v509
  %v520 = vpack.c.b16 %v512, %v511
  %529 = vmatprep.subr.bf16.mxu0 0
  %530 = vmatpush1.bf16.msra.mxu0 %v513
  %531 = vmatprep.subr.bf16.mxu0 0
  %532 = vmatpush1.bf16.msra.mxu0 %v514
  %533 = vmatprep.subr.bf16.mxu0 0
  %534 = vmatpush1.bf16.msra.mxu0 %v515
  %535 = vmatprep.subr.bf16.mxu0 0
  %536 = vmatpush1.bf16.msra.mxu0 %v516
  %537 = vmatprep.subr.bf16.mxu0 0
  %538 = vmatpush1.bf16.msra.mxu0 %v517
  %539 = vmatprep.subr.bf16.mxu0 0
  %540 = vmatpush1.bf16.msra.mxu0 %v518
  %541 = vmatprep.subr.bf16.mxu0 0
  %542 = vmatpush1.bf16.msra.mxu0 %v519
  %543 = vmatprep.subr.bf16.mxu0 0
  %544 = vmatpush1.bf16.msra.mxu0 %v520
  %545 = vmatprep.subr.bf16.mxu0 0
  %546 = vmatpush1.bf16.msra.mxu0 0
  %547 = vmatprep.subr.bf16.mxu0 0
  %548 = vmatpush1.bf16.msra.mxu0 0
  %549 = vmatprep.subr.bf16.mxu0 0
  %550 = vmatpush1.bf16.msra.mxu0 0
  %551 = vmatprep.subr.bf16.mxu0 0
  %552 = vmatpush1.bf16.msra.mxu0 0
  %553 = vmatprep.subr.bf16.mxu0 0
  %554 = vmatpush1.bf16.msra.mxu0 0
  %555 = vmatprep.subr.bf16.mxu0 0
  %556 = vmatpush1.bf16.msra.mxu0 0
  %557 = vmatprep.subr.bf16.mxu0 0
  %558 = vmatpush1.bf16.msra.mxu0 0
  %559 = vmatprep.subr.bf16.mxu0 0
  %560 = vmatpush1.bf16.msra.mxu0 0
  %561 = vmatprep.mubr.bf16.mxu0 0
  %562 = vmatmul.mubr.bf16.gmra.mrb[0].mxu0 %v462
  %v563 = vpop.f32.mrb[0].mxu0
  %v564 = vadd.f32 0.0, %v563
  %v565 = vpop.f32.mrb[0].mxu0
  %v566 = vpop.f32.mrb[0].mxu0
  %v567 = vpop.f32.mrb[0].mxu0
  %568 = vdwg.mxu0
  %v569 = vadd.f32 %v464, %v564
  %v570 = vtanh.pop %v569
  %s571 = scalar_lea.vmem [#allocation2], 32
  %572 = vst [vmem:[%s571] sm:$0xff] %v570
  %v573 = vpack.c.bf16 %v570, %v570
  %s574 = scalar_lea.vmem %s0, 40
  %v575 = vld [vmem:[%s574] sm:$0xff]
  %v576 = vld [vmem:[%s1] sm:$0xf]
  %v577 = vld [vmem:[%s1 + $0x4] sm:$0xf]
  %v578 = vld [vmem:[%s1 + $0x8] sm:$0xf]
  %v579 = vld [vmem:[%s1 + $0xc] sm:$0xf]
  %v580 = vld [vmem:[%s1 + $0x10] sm:$0xf]
  %v581 = vld [vmem:[%s1 + $0x14] sm:$0xf]
  %v582 = vld [vmem:[%s1 + $0x18] sm:$0xf]
  %v583 = vld [vmem:[%s1 + $0x1c] sm:$0xf]
  %v584 = vld [vmem:[%s1 + $0x20] sm:$0xf]
  %v585 = vld [vmem:[%s1 + $0x24] sm:$0xf]
  %v586 = vld [vmem:[%s1 + $0x28] sm:$0xf]
  %v587 = vld [vmem:[%s1 + $0x2c] sm:$0xf]
  %v588 = vld [vmem:[%s1 + $0x30] sm:$0xf]
  %v589 = vld [vmem:[%s1 + $0x34] sm:$0xf]
  %v590 = vld [vmem:[%s1 + $0x38] sm:$0xf]
  %v591 = vld [vmem:[%s1 + $0x3c] sm:$0xf]
  %v608 = vunpack.c.l.b16 %v576
  %v609 = vunpack.c.l.b16 %v577
  %v610 = vunpack.c.l.b16 %v578
  %v611 = vunpack.c.l.b16 %v579
  %v612 = vunpack.c.l.b16 %v580
  %v613 = vunpack.c.l.b16 %v581
  %v614 = vunpack.c.l.b16 %v582
  %v615 = vunpack.c.l.b16 %v583
  %v616 = vunpack.c.l.b16 %v584
  %v617 = vunpack.c.l.b16 %v585
  %v618 = vunpack.c.l.b16 %v586
  %v619 = vunpack.c.l.b16 %v587
  %v620 = vunpack.c.l.b16 %v588
  %v621 = vunpack.c.l.b16 %v589
  %v622 = vunpack.c.l.b16 %v590
  %v623 = vunpack.c.l.b16 %v591
  %v624 = vpack.c.b16 %v609, %v608
  %v625 = vpack.c.b16 %v611, %v610
  %v626 = vpack.c.b16 %v613, %v612
  %v627 = vpack.c.b16 %v615, %v614
  %v628 = vpack.c.b16 %v617, %v616
  %v629 = vpack.c.b16 %v619, %v618
  %v630 = vpack.c.b16 %v621, %v620
  %v631 = vpack.c.b16 %v623, %v622
  %640 = vmatprep.subr.bf16.mxu0 0
  %641 = vmatpush1.bf16.msra.mxu0 %v624
  %642 = vmatprep.subr.bf16.mxu0 0
  %643 = vmatpush1.bf16.msra.mxu0 %v625
  %644 = vmatprep.subr.bf16.mxu0 0
  %645 = vmatpush1.bf16.msra.mxu0 %v626
  %646 = vmatprep.subr.bf16.mxu0 0
  %647 = vmatpush1.bf16.msra.mxu0 %v627
  %648 = vmatprep.subr.bf16.mxu0 0
  %649 = vmatpush1.bf16.msra.mxu0 %v628
  %650 = vmatprep.subr.bf16.mxu0 0
  %651 = vmatpush1.bf16.msra.mxu0 %v629
  %652 = vmatprep.subr.bf16.mxu0 0
  %653 = vmatpush1.bf16.msra.mxu0 %v630
  %654 = vmatprep.subr.bf16.mxu0 0
  %655 = vmatpush1.bf16.msra.mxu0 %v631
  %656 = vmatprep.subr.bf16.mxu0 0
  %657 = vmatpush1.bf16.msra.mxu0 0
  %658 = vmatprep.subr.bf16.mxu0 0
  %659 = vmatpush1.bf16.msra.mxu0 0
  %660 = vmatprep.subr.bf16.mxu0 0
  %661 = vmatpush1.bf16.msra.mxu0 0
  %662 = vmatprep.subr.bf16.mxu0 0
  %663 = vmatpush1.bf16.msra.mxu0 0
  %664 = vmatprep.subr.bf16.mxu0 0
  %665 = vmatpush1.bf16.msra.mxu0 0
  %666 = vmatprep.subr.bf16.mxu0 0
  %667 = vmatpush1.bf16.msra.mxu0 0
  %668 = vmatprep.subr.bf16.mxu0 0
  %669 = vmatpush1.bf16.msra.mxu0 0
  %670 = vmatprep.subr.bf16.mxu0 0
  %671 = vmatpush1.bf16.msra.mxu0 0
  %672 = vmatprep.mubr.bf16.mxu0 0
  %673 = vmatmul.mubr.bf16.gmra.mrb[0].mxu0 %v573
  %v674 = vpop.f32.mrb[0].mxu0
  %v675 = vadd.f32 0.0, %v674
  %v676 = vpop.f32.mrb[0].mxu0
  %v677 = vpop.f32.mrb[0].mxu0
  %v678 = vpop.f32.mrb[0].mxu0
  %679 = vdwg.mxu0
  %v680 = vadd.f32 %v575, %v675
  %v681 = vtanh.pop %v680
  %s682 = scalar_lea.vmem [#allocation2], 40
  %683 = vst [vmem:[%s682] sm:$0xff] %v681
  %v684 = vpack.c.bf16 %v681, %v681
  %s685 = scalar_lea.vmem %s0, 48
  %v686 = vld [vmem:[%s685] sm:$0xff]
  %v687 = vld [vmem:[%s1] sm:$0xf]
  %v688 = vld [vmem:[%s1 + $0x4] sm:$0xf]
  %v689 = vld [vmem:[%s1 + $0x8] sm:$0xf]
  %v690 = vld [vmem:[%s1 + $0xc] sm:$0xf]
  %v691 = vld [vmem:[%s1 + $0x10] sm:$0xf]
  %v692 = vld [vmem:[%s1 + $0x14] sm:$0xf]
  %v693 = vld [vmem:[%s1 + $0x18] sm:$0xf]
  %v694 = vld [vmem:[%s1 + $0x1c] sm:$0xf]
  %v695 = vld [vmem:[%s1 + $0x20] sm:$0xf]
  %v696 = vld [vmem:[%s1 + $0x24] sm:$0xf]
  %v697 = vld [vmem:[%s1 + $0x28] sm:$0xf]
  %v698 = vld [vmem:[%s1 + $0x2c] sm:$0xf]
  %v699 = vld [vmem:[%s1 + $0x30] sm:$0xf]
  %v700 = vld [vmem:[%s1 + $0x34] sm:$0xf]
  %v701 = vld [vmem:[%s1 + $0x38] sm:$0xf]
  %v702 = vld [vmem:[%s1 + $0x3c] sm:$0xf]
  %v719 = vunpack.c.l.b16 %v687
  %v720 = vunpack.c.l.b16 %v688
  %v721 = vunpack.c.l.b16 %v689
  %v722 = vunpack.c.l.b16 %v690
  %v723 = vunpack.c.l.b16 %v691
  %v724 = vunpack.c.l.b16 %v692
  %v725 = vunpack.c.l.b16 %v693
  %v726 = vunpack.c.l.b16 %v694
  %v727 = vunpack.c.l.b16 %v695
  %v728 = vunpack.c.l.b16 %v696
  %v729 = vunpack.c.l.b16 %v697
  %v730 = vunpack.c.l.b16 %v698
  %v731 = vunpack.c.l.b16 %v699
  %v732 = vunpack.c.l.b16 %v700
  %v733 = vunpack.c.l.b16 %v701
  %v734 = vunpack.c.l.b16 %v702
  %v735 = vpack.c.b16 %v720, %v719
  %v736 = vpack.c.b16 %v722, %v721
  %v737 = vpack.c.b16 %v724, %v723
  %v738 = vpack.c.b16 %v726, %v725
  %v739 = vpack.c.b16 %v728, %v727
  %v740 = vpack.c.b16 %v730, %v729
  %v741 = vpack.c.b16 %v732, %v731
  %v742 = vpack.c.b16 %v734, %v733
  %751 = vmatprep.subr.bf16.mxu0 0
  %752 = vmatpush1.bf16.msra.mxu0 %v735
  %753 = vmatprep.subr.bf16.mxu0 0
  %754 = vmatpush1.bf16.msra.mxu0 %v736
  %755 = vmatprep.subr.bf16.mxu0 0
  %756 = vmatpush1.bf16.msra.mxu0 %v737
  %757 = vmatprep.subr.bf16.mxu0 0
  %758 = vmatpush1.bf16.msra.mxu0 %v738
  %759 = vmatprep.subr.bf16.mxu0 0
  %760 = vmatpush1.bf16.msra.mxu0 %v739
  %761 = vmatprep.subr.bf16.mxu0 0
  %762 = vmatpush1.bf16.msra.mxu0 %v740
  %763 = vmatprep.subr.bf16.mxu0 0
  %764 = vmatpush1.bf16.msra.mxu0 %v741
  %765 = vmatprep.subr.bf16.mxu0 0
  %766 = vmatpush1.bf16.msra.mxu0 %v742
  %767 = vmatprep.subr.bf16.mxu0 0
  %768 = vmatpush1.bf16.msra.mxu0 0
  %769 = vmatprep.subr.bf16.mxu0 0
  %770 = vmatpush1.bf16.msra.mxu0 0
  %771 = vmatprep.subr.bf16.mxu0 0
  %772 = vmatpush1.bf16.msra.mxu0 0
  %773 = vmatprep.subr.bf16.mxu0 0
  %774 = vmatpush1.bf16.msra.mxu0 0
  %775 = vmatprep.subr.bf16.mxu0 0
  %776 = vmatpush1.bf16.msra.mxu0 0
  %777 = vmatprep.subr.bf16.mxu0 0
  %778 = vmatpush1.bf16.msra.mxu0 0
  %779 = vmatprep.subr.bf16.mxu0 0
  %780 = vmatpush1.bf16.msra.mxu0 0
  %781 = vmatprep.subr.bf16.mxu0 0
  %782 = vmatpush1.bf16.msra.mxu0 0
  %783 = vmatprep.mubr.bf16.mxu0 0
  %784 = vmatmul.mubr.bf16.gmra.mrb[0].mxu0 %v684
  %v785 = vpop.f32.mrb[0].mxu0
  %v786 = vadd.f32 0.0, %v785
  %v787 = vpop.f32.mrb[0].mxu0
  %v788 = vpop.f32.mrb[0].mxu0
  %v789 = vpop.f32.mrb[0].mxu0
  %790 = vdwg.mxu0
  %v791 = vadd.f32 %v686, %v786
  %v792 = vtanh.pop %v791
  %s793 = scalar_lea.vmem [#allocation2], 48
  %794 = vst [vmem:[%s793] sm:$0xff] %v792
  %v795 = vpack.c.bf16 %v792, %v792
  %s796 = scalar_lea.vmem %s0, 56
  %v797 = vld [vmem:[%s796] sm:$0xff]
  %v798 = vld [vmem:[%s1] sm:$0xf]
  %v799 = vld [vmem:[%s1 + $0x4] sm:$0xf]
  %v800 = vld [vmem:[%s1 + $0x8] sm:$0xf]
  %v801 = vld [vmem:[%s1 + $0xc] sm:$0xf]
  %v802 = vld [vmem:[%s1 + $0x10] sm:$0xf]
  %v803 = vld [vmem:[%s1 + $0x14] sm:$0xf]
  %v804 = vld [vmem:[%s1 + $0x18] sm:$0xf]
  %v805 = vld [vmem:[%s1 + $0x1c] sm:$0xf]
  %v806 = vld [vmem:[%s1 + $0x20] sm:$0xf]
  %v807 = vld [vmem:[%s1 + $0x24] sm:$0xf]
  %v808 = vld [vmem:[%s1 + $0x28] sm:$0xf]
  %v809 = vld [vmem:[%s1 + $0x2c] sm:$0xf]
  %v810 = vld [vmem:[%s1 + $0x30] sm:$0xf]
  %v811 = vld [vmem:[%s1 + $0x34] sm:$0xf]
  %v812 = vld [vmem:[%s1 + $0x38] sm:$0xf]
  %v813 = vld [vmem:[%s1 + $0x3c] sm:$0xf]
  %v830 = vunpack.c.l.b16 %v798
  %v831 = vunpack.c.l.b16 %v799
  %v832 = vunpack.c.l.b16 %v800
  %v833 = vunpack.c.l.b16 %v801
  %v834 = vunpack.c.l.b16 %v802
  %v835 = vunpack.c.l.b16 %v803
  %v836 = vunpack.c.l.b16 %v804
  %v837 = vunpack.c.l.b16 %v805
  %v838 = vunpack.c.l.b16 %v806
  %v839 = vunpack.c.l.b16 %v807
  %v840 = vunpack.c.l.b16 %v808
  %v841 = vunpack.c.l.b16 %v809
  %v842 = vunpack.c.l.b16 %v810
  %v843 = vunpack.c.l.b16 %v811
  %v844 = vunpack.c.l.b16 %v812
  %v845 = vunpack.c.l.b16 %v813
  %v846 = vpack.c.b16 %v831, %v830
  %v847 = vpack.c.b16 %v833, %v832
  %v848 = vpack.c.b16 %v835, %v834
  %v849 = vpack.c.b16 %v837, %v836
  %v850 = vpack.c.b16 %v839, %v838
  %v851 = vpack.c.b16 %v841, %v840
  %v852 = vpack.c.b16 %v843, %v842
  %v853 = vpack.c.b16 %v845, %v844
  %862 = vmatprep.subr.bf16.mxu0 0
  %863 = vmatpush1.bf16.msra.mxu0 %v846
  %864 = vmatprep.subr.bf16.mxu0 0
  %865 = vmatpush1.bf16.msra.mxu0 %v847
  %866 = vmatprep.subr.bf16.mxu0 0
  %867 = vmatpush1.bf16.msra.mxu0 %v848
  %868 = vmatprep.subr.bf16.mxu0 0
  %869 = vmatpush1.bf16.msra.mxu0 %v849
  %870 = vmatprep.subr.bf16.mxu0 0
  %871 = vmatpush1.bf16.msra.mxu0 %v850
  %872 = vmatprep.subr.bf16.mxu0 0
  %873 = vmatpush1.bf16.msra.mxu0 %v851
  %874 = vmatprep.subr.bf16.mxu0 0
  %875 = vmatpush1.bf16.msra.mxu0 %v852
  %876 = vmatprep.subr.bf16.mxu0 0
  %877 = vmatpush1.bf16.msra.mxu0 %v853
  %878 = vmatprep.subr.bf16.mxu0 0
  %879 = vmatpush1.bf16.msra.mxu0 0
  %880 = vmatprep.subr.bf16.mxu0 0
  %881 = vmatpush1.bf16.msra.mxu0 0
  %882 = vmatprep.subr.bf16.mxu0 0
  %883 = vmatpush1.bf16.msra.mxu0 0
  %884 = vmatprep.subr.bf16.mxu0 0
  %885 = vmatpush1.bf16.msra.mxu0 0
  %886 = vmatprep.subr.bf16.mxu0 0
  %887 = vmatpush1.bf16.msra.mxu0 0
  %888 = vmatprep.subr.bf16.mxu0 0
  %889 = vmatpush1.bf16.msra.mxu0 0
  %890 = vmatprep.subr.bf16.mxu0 0
  %891 = vmatpush1.bf16.msra.mxu0 0
  %892 = vmatprep.subr.bf16.mxu0 0
  %893 = vmatpush1.bf16.msra.mxu0 0
  %894 = vmatprep.mubr.bf16.mxu0 0
  %895 = vmatmul.mubr.bf16.gmra.mrb[0].mxu0 %v795
  %v896 = vpop.f32.mrb[0].mxu0
  %v897 = vadd.f32 0.0, %v896
  %v898 = vpop.f32.mrb[0].mxu0
  %v899 = vpop.f32.mrb[0].mxu0
  %v900 = vpop.f32.mrb[0].mxu0
  %901 = vdwg.mxu0
  %v902 = vadd.f32 %v797, %v897
  %v903 = vtanh.pop %v902
  %s904 = scalar_lea.vmem [#allocation2], 56
  %905 = vst [vmem:[%s904] sm:$0xff] %v903
  %v906 = vld [vmem:[#allocation2] sm:$0xff]
  %v907 = vld [vmem:[#allocation2 + $0x8] sm:$0xff]
  %v908 = vld [vmem:[#allocation2 + $0x10] sm:$0xff]
  %v909 = vld [vmem:[#allocation2 + $0x18] sm:$0xff]
  %v910 = vld [vmem:[#allocation2 + $0x20] sm:$0xff]
  %v911 = vld [vmem:[#allocation2 + $0x28] sm:$0xff]
  %v912 = vld [vmem:[#allocation2 + $0x30] sm:$0xff]
  %v913 = vld [vmem:[#allocation2 + $0x38] sm:$0xff]
  %v914 = vpack.c.bf16 %v907, %v906
  %v915 = vpack.c.bf16 %v909, %v908
  %v916 = vpack.c.bf16 %v911, %v910
  %v917 = vpack.c.bf16 %v913, %v912
  %v918 = vld [vmem:[%s2] sm:$0xf]
  %v919 = vld [vmem:[%s2 + $0x4] sm:$0xf]
  %v920 = vld [vmem:[%s2 + $0x8] sm:$0xf]
  %v921 = vld [vmem:[%s2 + $0xc] sm:$0xf]
  %v922 = vld [vmem:[%s2 + $0x10] sm:$0xf]
  %v923 = vld [vmem:[%s2 + $0x14] sm:$0xf]
  %v924 = vld [vmem:[%s2 + $0x18] sm:$0xf]
  %v925 = vld [vmem:[%s2 + $0x1c] sm:$0xf]
  %v926 = vld [vmem:[%s2 + $0x20] sm:$0xf]
  %v927 = vld [vmem:[%s2 + $0x24] sm:$0xf]
  %v928 = vld [vmem:[%s2 + $0x28] sm:$0xf]
  %v929 = vld [vmem:[%s2 + $0x2c] sm:$0xf]
  %v930 = vld [vmem:[%s2 + $0x30] sm:$0xf]
  %v931 = vld [vmem:[%s2 + $0x34] sm:$0xf]
  %v932 = vld [vmem:[%s2 + $0x38] sm:$0xf]
  %v933 = vld [vmem:[%s2 + $0x3c] sm:$0xf]
  %v934 = vld [vmem:[%s4] sm:$0x1]
  %v936 = vlaneseq
  %v937 = vshrl.u32 %v936, 7
  %v938 = vsub.s32 0, %v937
  %v939 = vrot.slane %v934, %v938
  %v957 = vunpack.c.l.b16 %v918
  %v958 = vunpack.c.l.b16 %v919
  %v959 = vunpack.c.l.b16 %v920
  %v960 = vunpack.c.l.b16 %v921
  %v961 = vunpack.c.l.b16 %v922
  %v962 = vunpack.c.l.b16 %v923
  %v963 = vunpack.c.l.b16 %v924
  %v964 = vunpack.c.l.b16 %v925
  %v965 = vunpack.c.l.b16 %v926
  %v966 = vunpack.c.l.b16 %v927
  %v967 = vunpack.c.l.b16 %v928
  %v968 = vunpack.c.l.b16 %v929
  %v969 = vunpack.c.l.b16 %v930
  %v970 = vunpack.c.l.b16 %v931
  %v971 = vunpack.c.l.b16 %v932
  %v972 = vunpack.c.l.b16 %v933
  %v973 = vpack.c.b16 %v958, %v957
  %v974 = vpack.c.b16 %v960, %v959
  %v975 = vpack.c.b16 %v962, %v961
  %v976 = vpack.c.b16 %v964, %v963
  %v977 = vpack.c.b16 %v966, %v965
  %v978 = vpack.c.b16 %v968, %v967
  %v979 = vpack.c.b16 %v970, %v969
  %v980 = vpack.c.b16 %v972, %v971
  %989 = vmatprep.subr.bf16.mxu0 0
  %990 = vmatpush1.bf16.msra.mxu0 %v973
  %991 = vmatprep.subr.bf16.mxu0 0
  %992 = vmatpush1.bf16.msra.mxu0 %v974
  %993 = vmatprep.subr.bf16.mxu0 0
  %994 = vmatpush1.bf16.msra.mxu0 %v975
  %995 = vmatprep.subr.bf16.mxu0 0
  %996 = vmatpush1.bf16.msra.mxu0 %v976
  %997 = vmatprep.subr.bf16.mxu0 0
  %998 = vmatpush1.bf16.msra.mxu0 %v977
  %999 = vmatprep.subr.bf16.mxu0 0
  %1000 = vmatpush1.bf16.msra.mxu0 %v978
  %1001 = vmatprep.subr.bf16.mxu0 0
  %1002 = vmatpush1.bf16.msra.mxu0 %v979
  %1003 = vmatprep.subr.bf16.mxu0 0
  %1004 = vmatpush1.bf16.msra.mxu0 %v980
  %1005 = vmatprep.subr.bf16.mxu0 0
  %1006 = vmatpush1.bf16.msra.mxu0 0
  %1007 = vmatprep.subr.bf16.mxu0 0
  %1008 = vmatpush1.bf16.msra.mxu0 0
  %1009 = vmatprep.subr.bf16.mxu0 0
  %1010 = vmatpush1.bf16.msra.mxu0 0
  %1011 = vmatprep.subr.bf16.mxu0 0
  %1012 = vmatpush1.bf16.msra.mxu0 0
  %1013 = vmatprep.subr.bf16.mxu0 0
  %1014 = vmatpush1.bf16.msra.mxu0 0
  %1015 = vmatprep.subr.bf16.mxu0 0
  %1016 = vmatpush1.bf16.msra.mxu0 0
  %1017 = vmatprep.subr.bf16.mxu0 0
  %1018 = vmatpush1.bf16.msra.mxu0 0
  %1019 = vmatprep.subr.bf16.mxu0 0
  %1020 = vmatpush1.bf16.msra.mxu0 0
  %1021 = vmatprep.mubr.bf16.mxu0 0
  %1022 = vmatmul.mubr.bf16.gmra.mrb[0].mxu0 %v914
  %v1023 = vpop.f32.mrb[0].mxu0
  %v1024 = vadd.f32 %v939, %v1023
  %v1025 = vpop.f32.mrb[0].mxu0
  %v1026 = vpop.f32.mrb[0].mxu0
  %v1027 = vadd.f32 %v939, %v1026
  %v1028 = vpop.f32.mrb[0].mxu0
  %1029 = vmatprep.mubr.bf16.mxu0 0
  %1030 = vmatmul.mubr.bf16.gmra.mrb[0].mxu0 %v915
  %v1031 = vpop.f32.mrb[0].mxu0
  %v1032 = vadd.f32 %v939, %v1031
  %v1033 = vpop.f32.mrb[0].mxu0
  %v1034 = vpop.f32.mrb[0].mxu0
  %v1035 = vadd.f32 %v939, %v1034
  %v1036 = vpop.f32.mrb[0].mxu0
  %1037 = vmatprep.mubr.bf16.mxu0 0
  %1038 = vmatmul.mubr.bf16.gmra.mrb[0].mxu0 %v916
  %v1039 = vpop.f32.mrb[0].mxu0
  %v1040 = vadd.f32 %v939, %v1039
  %v1041 = vpop.f32.mrb[0].mxu0
  %v1042 = vpop.f32.mrb[0].mxu0
  %v1043 = vadd.f32 %v939, %v1042
  %v1044 = vpop.f32.mrb[0].mxu0
  %1045 = vmatprep.mubr.bf16.mxu0 0
  %1046 = vmatmul.mubr.bf16.gmra.mrb[0].mxu0 %v917
  %v1047 = vpop.f32.mrb[0].mxu0
  %v1048 = vadd.f32 %v939, %v1047
  %v1049 = vpop.f32.mrb[0].mxu0
  %v1050 = vpop.f32.mrb[0].mxu0
  %v1051 = vadd.f32 %v939, %v1050
  %v1052 = vpop.f32.mrb[0].mxu0
  %1053 = vdwg.mxu0
  %1054 = vst [vmem:[#allocation3] sm:$0xff] %v1024
  %1055 = vst [vmem:[#allocation3 + $0x8] sm:$0xff] %v1027
  %1056 = vst [vmem:[#allocation3 + $0x10] sm:$0xff] %v1032
  %1057 = vst [vmem:[#allocation3 + $0x18] sm:$0xff] %v1035
  %1058 = vst [vmem:[#allocation3 + $0x20] sm:$0xff] %v1040
  %1059 = vst [vmem:[#allocation3 + $0x28] sm:$0xff] %v1043
  %1060 = vst [vmem:[#allocation3 + $0x30] sm:$0xff] %v1048
  %1061 = vst [vmem:[#allocation3 + $0x38] sm:$0xff] %v1051
  %v1062 = vld [vmem:[#allocation3] sm:$0xff]
  %v1063 = vld [vmem:[%s3] sm:$0xf]
  %v1064 = vld [vmem:[%s3 + $0x4] sm:$0xf]
  %v1065 = vld [vmem:[%s3 + $0x8] sm:$0xf]
  %v1066 = vld [vmem:[%s3 + $0xc] sm:$0xf]
  %v1067 = vld [vmem:[%s3 + $0x10] sm:$0xf]
  %v1068 = vld [vmem:[%s3 + $0x14] sm:$0xf]
  %v1069 = vld [vmem:[%s3 + $0x18] sm:$0xf]
  %v1070 = vld [vmem:[%s3 + $0x1c] sm:$0xf]
  %v1071 = vld [vmem:[%s3 + $0x20] sm:$0xf]
  %v1072 = vld [vmem:[%s3 + $0x24] sm:$0xf]
  %v1073 = vld [vmem:[%s3 + $0x28] sm:$0xf]
  %v1074 = vld [vmem:[%s3 + $0x2c] sm:$0xf]
  %v1075 = vld [vmem:[%s3 + $0x30] sm:$0xf]
  %v1076 = vld [vmem:[%s3 + $0x34] sm:$0xf]
  %v1077 = vld [vmem:[%s3 + $0x38] sm:$0xf]
  %v1078 = vld [vmem:[%s3 + $0x3c] sm:$0xf]
  %v1095 = vunpack.c.l.b16 %v1063
  %v1096 = vunpack.c.l.b16 %v1064
  %v1097 = vunpack.c.l.b16 %v1065
  %v1098 = vunpack.c.l.b16 %v1066
  %v1099 = vunpack.c.l.b16 %v1067
  %v1100 = vunpack.c.l.b16 %v1068
  %v1101 = vunpack.c.l.b16 %v1069
  %v1102 = vunpack.c.l.b16 %v1070
  %v1103 = vunpack.c.l.b16 %v1071
  %v1104 = vunpack.c.l.b16 %v1072
  %v1105 = vunpack.c.l.b16 %v1073
  %v1106 = vunpack.c.l.b16 %v1074
  %v1107 = vunpack.c.l.b16 %v1075
  %v1108 = vunpack.c.l.b16 %v1076
  %v1109 = vunpack.c.l.b16 %v1077
  %v1110 = vunpack.c.l.b16 %v1078
  %v1111 = vpack.c.b16 %v1096, %v1095
  %v1112 = vpack.c.b16 %v1098, %v1097
  %v1113 = vpack.c.b16 %v1100, %v1099
  %v1114 = vpack.c.b16 %v1102, %v1101
  %v1115 = vpack.c.b16 %v1104, %v1103
  %v1116 = vpack.c.b16 %v1106, %v1105
  %v1117 = vpack.c.b16 %v1108, %v1107
  %v1118 = vpack.c.b16 %v1110, %v1109
  %1127 = vmatprep.subr.bf16.mxu0 0
  %1128 = vmatpush1.bf16.msra.mxu0 %v1111
  %1129 = vmatprep.subr.bf16.mxu0 0
  %1130 = vmatpush1.bf16.msra.mxu0 %v1112
  %1131 = vmatprep.subr.bf16.mxu0 0
  %1132 = vmatpush1.bf16.msra.mxu0 %v1113
  %1133 = vmatprep.subr.bf16.mxu0 0
  %1134 = vmatpush1.bf16.msra.mxu0 %v1114
  %1135 = vmatprep.subr.bf16.mxu0 0
  %1136 = vmatpush1.bf16.msra.mxu0 %v1115
  %1137 = vmatprep.subr.bf16.mxu0 0
  %1138 = vmatpush1.bf16.msra.mxu0 %v1116
  %1139 = vmatprep.subr.bf16.mxu0 0
  %1140 = vmatpush1.bf16.msra.mxu0 %v1117
  %1141 = vmatprep.subr.bf16.mxu0 0
  %1142 = vmatpush1.bf16.msra.mxu0 %v1118
  %1143 = vmatprep.subr.bf16.mxu0 0
  %1144 = vmatpush1.bf16.msra.mxu0 0
  %1145 = vmatprep.subr.bf16.mxu0 0
  %1146 = vmatpush1.bf16.msra.mxu0 0
  %1147 = vmatprep.subr.bf16.mxu0 0
  %1148 = vmatpush1.bf16.msra.mxu0 0
  %1149 = vmatprep.subr.bf16.mxu0 0
  %1150 = vmatpush1.bf16.msra.mxu0 0
  %1151 = vmatprep.subr.bf16.mxu0 0
  %1152 = vmatpush1.bf16.msra.mxu0 0
  %1153 = vmatprep.subr.bf16.mxu0 0
  %1154 = vmatpush1.bf16.msra.mxu0 0
  %1155 = vmatprep.subr.bf16.mxu0 0
  %1156 = vmatpush1.bf16.msra.mxu0 0
  %1157 = vmatprep.subr.bf16.mxu0 0
  %1158 = vmatpush1.bf16.msra.mxu0 0
  %1159 = vmatprep.mubr.bf16.mxu0 0
  %1160 = vmatmul.mubr.bf16.gmra.mrb[0].mxu0 0
  %v1161 = vpop.f32.mrb[0].mxu0
  %v1162 = vadd.f32 0.0, %v1161
  %v1163 = vpop.f32.mrb[0].mxu0
  %v1164 = vpop.f32.mrb[0].mxu0
  %v1165 = vpop.f32.mrb[0].mxu0
  %1166 = vdwg.mxu0
  %v1167 = vadd.f32 %v1062, %v1162
  %v1168 = vtanh.pop %v1167
  %s1169 = scalar_lea.vmem [#allocation3], 8
  %v1170 = vld [vmem:[%s1169] sm:$0xff]
  %v1171 = vpack.c.bf16 %v1168, %v1168
  %1172 = vmatprep.subr.bf16.mxu0 0
  %1173 = vmatpush1.bf16.msra.mxu0 %v1111
  %1174 = vmatprep.subr.bf16.mxu0 0
  %1175 = vmatpush1.bf16.msra.mxu0 %v1112
  %1176 = vmatprep.subr.bf16.mxu0 0
  %1177 = vmatpush1.bf16.msra.mxu0 %v1113
  %1178 = vmatprep.subr.bf16.mxu0 0
  %1179 = vmatpush1.bf16.msra.mxu0 %v1114
  %1180 = vmatprep.subr.bf16.mxu0 0
  %1181 = vmatpush1.bf16.msra.mxu0 %v1115
  %1182 = vmatprep.subr.bf16.mxu0 0
  %1183 = vmatpush1.bf16.msra.mxu0 %v1116
  %1184 = vmatprep.subr.bf16.mxu0 0
  %1185 = vmatpush1.bf16.msra.mxu0 %v1117
  %1186 = vmatprep.subr.bf16.mxu0 0
  %1187 = vmatpush1.bf16.msra.mxu0 %v1118
  %1188 = vmatprep.subr.bf16.mxu0 0
  %1189 = vmatpush1.bf16.msra.mxu0 0
  %1190 = vmatprep.subr.bf16.mxu0 0
  %1191 = vmatpush1.bf16.msra.mxu0 0
  %1192 = vmatprep.subr.bf16.mxu0 0
  %1193 = vmatpush1.bf16.msra.mxu0 0
  %1194 = vmatprep.subr.bf16.mxu0 0
  %1195 = vmatpush1.bf16.msra.mxu0 0
  %1196 = vmatprep.subr.bf16.mxu0 0
  %1197 = vmatpush1.bf16.msra.mxu0 0
  %1198 = vmatprep.subr.bf16.mxu0 0
  %1199 = vmatpush1.bf16.msra.mxu0 0
  %1200 = vmatprep.subr.bf16.mxu0 0
  %1201 = vmatpush1.bf16.msra.mxu0 0
  %1202 = vmatprep.subr.bf16.mxu0 0
  %1203 = vmatpush1.bf16.msra.mxu0 0
  %1204 = vmatprep.mubr.bf16.mxu0 0
  %1205 = vmatmul.mubr.bf16.gmra.mrb[0].mxu0 %v1171
  %v1206 = vpop.f32.mrb[0].mxu0
  %v1207 = vadd.f32 0.0, %v1206
  %v1208 = vpop.f32.mrb[0].mxu0
  %v1209 = vpop.f32.mrb[0].mxu0
  %v1210 = vpop.f32.mrb[0].mxu0
  %1211 = vdwg.mxu0
  %v1212 = vadd.f32 %v1170, %v1207
  %v1213 = vtanh.pop %v1212
  %s1214 = scalar_lea.vmem [#allocation3], 16
  %v1215 = vld [vmem:[%s1214] sm:$0xff]
  %v1216 = vpack.c.bf16 %v1213, %v1213
  %1217 = vmatprep.subr.bf16.mxu0 0
  %1218 = vmatpush1.bf16.msra.mxu0 %v1111
  %1219 = vmatprep.subr.bf16.mxu0 0
  %1220 = vmatpush1.bf16.msra.mxu0 %v1112
  %1221 = vmatprep.subr.bf16.mxu0 0
  %1222 = vmatpush1.bf16.msra.mxu0 %v1113
  %1223 = vmatprep.subr.bf16.mxu0 0
  %1224 = vmatpush1.bf16.msra.mxu0 %v1114
  %1225 = vmatprep.subr.bf16.mxu0 0
  %1226 = vmatpush1.bf16.msra.mxu0 %v1115
  %1227 = vmatprep.subr.bf16.mxu0 0
  %1228 = vmatpush1.bf16.msra.mxu0 %v1116
  %1229 = vmatprep.subr.bf16.mxu0 0
  %1230 = vmatpush1.bf16.msra.mxu0 %v1117
  %1231 = vmatprep.subr.bf16.mxu0 0
  %1232 = vmatpush1.bf16.msra.mxu0 %v1118
  %1233 = vmatprep.subr.bf16.mxu0 0
  %1234 = vmatpush1.bf16.msra.mxu0 0
  %1235 = vmatprep.subr.bf16.mxu0 0
  %1236 = vmatpush1.bf16.msra.mxu0 0
  %1237 = vmatprep.subr.bf16.mxu0 0
  %1238 = vmatpush1.bf16.msra.mxu0 0
  %1239 = vmatprep.subr.bf16.mxu0 0
  %1240 = vmatpush1.bf16.msra.mxu0 0
  %1241 = vmatprep.subr.bf16.mxu0 0
  %1242 = vmatpush1.bf16.msra.mxu0 0
  %1243 = vmatprep.subr.bf16.mxu0 0
  %1244 = vmatpush1.bf16.msra.mxu0 0
  %1245 = vmatprep.subr.bf16.mxu0 0
  %1246 = vmatpush1.bf16.msra.mxu0 0
  %1247 = vmatprep.subr.bf16.mxu0 0
  %1248 = vmatpush1.bf16.msra.mxu0 0
  %1249 = vmatprep.mubr.bf16.mxu0 0
  %1250 = vmatmul.mubr.bf16.gmra.mrb[0].mxu0 %v1216
  %v1251 = vpop.f32.mrb[0].mxu0
  %v1252 = vadd.f32 0.0, %v1251
  %v1253 = vpop.f32.mrb[0].mxu0
  %v1254 = vpop.f32.mrb[0].mxu0
  %v1255 = vpop.f32.mrb[0].mxu0
  %1256 = vdwg.mxu0
  %v1257 = vadd.f32 %v1215, %v1252
  %v1258 = vtanh.pop %v1257
  %s1259 = scalar_lea.vmem [#allocation3], 24
  %v1260 = vld [vmem:[%s1259] sm:$0xff]
  %v1261 = vpack.c.bf16 %v1258, %v1258
  %1262 = vmatprep.subr.bf16.mxu0 0
  %1263 = vmatpush1.bf16.msra.mxu0 %v1111
  %1264 = vmatprep.subr.bf16.mxu0 0
  %1265 = vmatpush1.bf16.msra.mxu0 %v1112
  %1266 = vmatprep.subr.bf16.mxu0 0
  %1267 = vmatpush1.bf16.msra.mxu0 %v1113
  %1268 = vmatprep.subr.bf16.mxu0 0
  %1269 = vmatpush1.bf16.msra.mxu0 %v1114
  %1270 = vmatprep.subr.bf16.mxu0 0
  %1271 = vmatpush1.bf16.msra.mxu0 %v1115
  %1272 = vmatprep.subr.bf16.mxu0 0
  %1273 = vmatpush1.bf16.msra.mxu0 %v1116
  %1274 = vmatprep.subr.bf16.mxu0 0
  %1275 = vmatpush1.bf16.msra.mxu0 %v1117
  %1276 = vmatprep.subr.bf16.mxu0 0
  %1277 = vmatpush1.bf16.msra.mxu0 %v1118
  %1278 = vmatprep.subr.bf16.mxu0 0
  %1279 = vmatpush1.bf16.msra.mxu0 0
  %1280 = vmatprep.subr.bf16.mxu0 0
  %1281 = vmatpush1.bf16.msra.mxu0 0
  %1282 = vmatprep.subr.bf16.mxu0 0
  %1283 = vmatpush1.bf16.msra.mxu0 0
  %1284 = vmatprep.subr.bf16.mxu0 0
  %1285 = vmatpush1.bf16.msra.mxu0 0
  %1286 = vmatprep.subr.bf16.mxu0 0
  %1287 = vmatpush1.bf16.msra.mxu0 0
  %1288 = vmatprep.subr.bf16.mxu0 0
  %1289 = vmatpush1.bf16.msra.mxu0 0
  %1290 = vmatprep.subr.bf16.mxu0 0
  %1291 = vmatpush1.bf16.msra.mxu0 0
  %1292 = vmatprep.subr.bf16.mxu0 0
  %1293 = vmatpush1.bf16.msra.mxu0 0
  %1294 = vmatprep.mubr.bf16.mxu0 0
  %1295 = vmatmul.mubr.bf16.gmra.mrb[0].mxu0 %v1261
  %v1296 = vpop.f32.mrb[0].mxu0
  %v1297 = vadd.f32 0.0, %v1296
  %v1298 = vpop.f32.mrb[0].mxu0
  %v1299 = vpop.f32.mrb[0].mxu0
  %v1300 = vpop.f32.mrb[0].mxu0
  %1301 = vdwg.mxu0
  %v1302 = vadd.f32 %v1260, %v1297
  %v1303 = vtanh.pop %v1302
  %s1304 = scalar_lea.vmem [#allocation3], 32
  %v1305 = vld [vmem:[%s1304] sm:$0xff]
  %v1306 = vpack.c.bf16 %v1303, %v1303
  %1307 = vmatprep.subr.bf16.mxu0 0
  %1308 = vmatpush1.bf16.msra.mxu0 %v1111
  %1309 = vmatprep.subr.bf16.mxu0 0
  %1310 = vmatpush1.bf16.msra.mxu0 %v1112
  %1311 = vmatprep.subr.bf16.mxu0 0
  %1312 = vmatpush1.bf16.msra.mxu0 %v1113
  %1313 = vmatprep.subr.bf16.mxu0 0
  %1314 = vmatpush1.bf16.msra.mxu0 %v1114
  %1315 = vmatprep.subr.bf16.mxu0 0
  %1316 = vmatpush1.bf16.msra.mxu0 %v1115
  %1317 = vmatprep.subr.bf16.mxu0 0
  %1318 = vmatpush1.bf16.msra.mxu0 %v1116
  %1319 = vmatprep.subr.bf16.mxu0 0
  %1320 = vmatpush1.bf16.msra.mxu0 %v1117
  %1321 = vmatprep.subr.bf16.mxu0 0
  %1322 = vmatpush1.bf16.msra.mxu0 %v1118
  %1323 = vmatprep.subr.bf16.mxu0 0
  %1324 = vmatpush1.bf16.msra.mxu0 0
  %1325 = vmatprep.subr.bf16.mxu0 0
  %1326 = vmatpush1.bf16.msra.mxu0 0
  %1327 = vmatprep.subr.bf16.mxu0 0
  %1328 = vmatpush1.bf16.msra.mxu0 0
  %1329 = vmatprep.subr.bf16.mxu0 0
  %1330 = vmatpush1.bf16.msra.mxu0 0
  %1331 = vmatprep.subr.bf16.mxu0 0
  %1332 = vmatpush1.bf16.msra.mxu0 0
  %1333 = vmatprep.subr.bf16.mxu0 0
  %1334 = vmatpush1.bf16.msra.mxu0 0
  %1335 = vmatprep.subr.bf16.mxu0 0
  %1336 = vmatpush1.bf16.msra.mxu0 0
  %1337 = vmatprep.subr.bf16.mxu0 0
  %1338 = vmatpush1.bf16.msra.mxu0 0
  %1339 = vmatprep.mubr.bf16.mxu0 0
  %1340 = vmatmul.mubr.bf16.gmra.mrb[0].mxu0 %v1306
  %v1341 = vpop.f32.mrb[0].mxu0
  %v1342 = vadd.f32 0.0, %v1341
  %v1343 = vpop.f32.mrb[0].mxu0
  %v1344 = vpop.f32.mrb[0].mxu0
  %v1345 = vpop.f32.mrb[0].mxu0
  %1346 = vdwg.mxu0
  %v1347 = vadd.f32 %v1305, %v1342
  %v1348 = vtanh.pop %v1347
  %s1349 = scalar_lea.vmem [#allocation3], 40
  %v1350 = vld [vmem:[%s1349] sm:$0xff]
  %v1351 = vpack.c.bf16 %v1348, %v1348
  %1352 = vmatprep.subr.bf16.mxu0 0
  %1353 = vmatpush1.bf16.msra.mxu0 %v1111
  %1354 = vmatprep.subr.bf16.mxu0 0
  %1355 = vmatpush1.bf16.msra.mxu0 %v1112
  %1356 = vmatprep.subr.bf16.mxu0 0
  %1357 = vmatpush1.bf16.msra.mxu0 %v1113
  %1358 = vmatprep.subr.bf16.mxu0 0
  %1359 = vmatpush1.bf16.msra.mxu0 %v1114
  %1360 = vmatprep.subr.bf16.mxu0 0
  %1361 = vmatpush1.bf16.msra.mxu0 %v1115
  %1362 = vmatprep.subr.bf16.mxu0 0
  %1363 = vmatpush1.bf16.msra.mxu0 %v1116
  %1364 = vmatprep.subr.bf16.mxu0 0
  %1365 = vmatpush1.bf16.msra.mxu0 %v1117
  %1366 = vmatprep.subr.bf16.mxu0 0
  %1367 = vmatpush1.bf16.msra.mxu0 %v1118
  %1368 = vmatprep.subr.bf16.mxu0 0
  %1369 = vmatpush1.bf16.msra.mxu0 0
  %1370 = vmatprep.subr.bf16.mxu0 0
  %1371 = vmatpush1.bf16.msra.mxu0 0
  %1372 = vmatprep.subr.bf16.mxu0 0
  %1373 = vmatpush1.bf16.msra.mxu0 0
  %1374 = vmatprep.subr.bf16.mxu0 0
  %1375 = vmatpush1.bf16.msra.mxu0 0
  %1376 = vmatprep.subr.bf16.mxu0 0
  %1377 = vmatpush1.bf16.msra.mxu0 0
  %1378 = vmatprep.subr.bf16.mxu0 0
  %1379 = vmatpush1.bf16.msra.mxu0 0
  %1380 = vmatprep.subr.bf16.mxu0 0
  %1381 = vmatpush1.bf16.msra.mxu0 0
  %1382 = vmatprep.subr.bf16.mxu0 0
  %1383 = vmatpush1.bf16.msra.mxu0 0
  %1384 = vmatprep.mubr.bf16.mxu0 0
  %1385 = vmatmul.mubr.bf16.gmra.mrb[0].mxu0 %v1351
  %v1386 = vpop.f32.mrb[0].mxu0
  %v1387 = vadd.f32 0.0, %v1386
  %v1388 = vpop.f32.mrb[0].mxu0
  %v1389 = vpop.f32.mrb[0].mxu0
  %v1390 = vpop.f32.mrb[0].mxu0
  %1391 = vdwg.mxu0
  %v1392 = vadd.f32 %v1350, %v1387
  %v1393 = vtanh.pop %v1392
  %s1394 = scalar_lea.vmem [#allocation3], 48
  %v1395 = vld [vmem:[%s1394] sm:$0xff]
  %v1396 = vpack.c.bf16 %v1393, %v1393
  %1397 = vmatprep.subr.bf16.mxu0 0
  %1398 = vmatpush1.bf16.msra.mxu0 %v1111
  %1399 = vmatprep.subr.bf16.mxu0 0
  %1400 = vmatpush1.bf16.msra.mxu0 %v1112
  %1401 = vmatprep.subr.bf16.mxu0 0
  %1402 = vmatpush1.bf16.msra.mxu0 %v1113
  %1403 = vmatprep.subr.bf16.mxu0 0
  %1404 = vmatpush1.bf16.msra.mxu0 %v1114
  %1405 = vmatprep.subr.bf16.mxu0 0
  %1406 = vmatpush1.bf16.msra.mxu0 %v1115
  %1407 = vmatprep.subr.bf16.mxu0 0
  %1408 = vmatpush1.bf16.msra.mxu0 %v1116
  %1409 = vmatprep.subr.bf16.mxu0 0
  %1410 = vmatpush1.bf16.msra.mxu0 %v1117
  %1411 = vmatprep.subr.bf16.mxu0 0
  %1412 = vmatpush1.bf16.msra.mxu0 %v1118
  %1413 = vmatprep.subr.bf16.mxu0 0
  %1414 = vmatpush1.bf16.msra.mxu0 0
  %1415 = vmatprep.subr.bf16.mxu0 0
  %1416 = vmatpush1.bf16.msra.mxu0 0
  %1417 = vmatprep.subr.bf16.mxu0 0
  %1418 = vmatpush1.bf16.msra.mxu0 0
  %1419 = vmatprep.subr.bf16.mxu0 0
  %1420 = vmatpush1.bf16.msra.mxu0 0
  %1421 = vmatprep.subr.bf16.mxu0 0
  %1422 = vmatpush1.bf16.msra.mxu0 0
  %1423 = vmatprep.subr.bf16.mxu0 0
  %1424 = vmatpush1.bf16.msra.mxu0 0
  %1425 = vmatprep.subr.bf16.mxu0 0
  %1426 = vmatpush1.bf16.msra.mxu0 0
  %1427 = vmatprep.subr.bf16.mxu0 0
  %1428 = vmatpush1.bf16.msra.mxu0 0
  %1429 = vmatprep.mubr.bf16.mxu0 0
  %1430 = vmatmul.mubr.bf16.gmra.mrb[0].mxu0 %v1396
  %v1431 = vpop.f32.mrb[0].mxu0
  %v1432 = vadd.f32 0.0, %v1431
  %v1433 = vpop.f32.mrb[0].mxu0
  %v1434 = vpop.f32.mrb[0].mxu0
  %v1435 = vpop.f32.mrb[0].mxu0
  %1436 = vdwg.mxu0
  %v1437 = vadd.f32 %v1395, %v1432
  %v1438 = vtanh.pop %v1437
  %s1439 = scalar_lea.vmem [#allocation3], 56
  %v1440 = vld [vmem:[%s1439] sm:$0xff]
  %v1441 = vpack.c.bf16 %v1438, %v1438
  %1442 = vmatprep.subr.bf16.mxu0 0
  %1443 = vmatpush1.bf16.msra.mxu0 %v1111
  %1444 = vmatprep.subr.bf16.mxu0 0
  %1445 = vmatpush1.bf16.msra.mxu0 %v1112
  %1446 = vmatprep.subr.bf16.mxu0 0
  %1447 = vmatpush1.bf16.msra.mxu0 %v1113
  %1448 = vmatprep.subr.bf16.mxu0 0
  %1449 = vmatpush1.bf16.msra.mxu0 %v1114
  %1450 = vmatprep.subr.bf16.mxu0 0
  %1451 = vmatpush1.bf16.msra.mxu0 %v1115
  %1452 = vmatprep.subr.bf16.mxu0 0
  %1453 = vmatpush1.bf16.msra.mxu0 %v1116
  %1454 = vmatprep.subr.bf16.mxu0 0
  %1455 = vmatpush1.bf16.msra.mxu0 %v1117
  %1456 = vmatprep.subr.bf16.mxu0 0
  %1457 = vmatpush1.bf16.msra.mxu0 %v1118
  %1458 = vmatprep.subr.bf16.mxu0 0
  %1459 = vmatpush1.bf16.msra.mxu0 0
  %1460 = vmatprep.subr.bf16.mxu0 0
  %1461 = vmatpush1.bf16.msra.mxu0 0
  %1462 = vmatprep.subr.bf16.mxu0 0
  %1463 = vmatpush1.bf16.msra.mxu0 0
  %1464 = vmatprep.subr.bf16.mxu0 0
  %1465 = vmatpush1.bf16.msra.mxu0 0
  %1466 = vmatprep.subr.bf16.mxu0 0
  %1467 = vmatpush1.bf16.msra.mxu0 0
  %1468 = vmatprep.subr.bf16.mxu0 0
  %1469 = vmatpush1.bf16.msra.mxu0 0
  %1470 = vmatprep.subr.bf16.mxu0 0
  %1471 = vmatpush1.bf16.msra.mxu0 0
  %1472 = vmatprep.subr.bf16.mxu0 0
  %1473 = vmatpush1.bf16.msra.mxu0 0
  %1474 = vmatprep.mubr.bf16.mxu0 0
  %1475 = vmatmul.mubr.bf16.gmra.mrb[0].mxu0 %v1441
  %v1476 = vpop.f32.mrb[0].mxu0
  %v1477 = vadd.f32 0.0, %v1476
  %v1478 = vpop.f32.mrb[0].mxu0
  %v1479 = vpop.f32.mrb[0].mxu0
  %v1480 = vpop.f32.mrb[0].mxu0
  %1481 = vdwg.mxu0
  %v1482 = vadd.f32 %v1440, %v1477
  %v1483 = vtanh.pop %v1482
  %1484 = vst [vmem:[%s5] sm:$0xff] %v1483
  // Predicated region
  $region22: #{rnn_model_forward.1} parent=0 // pred_check
    _
  $region23: #{rnn_model_forward.1} parent=0 // pred_check_branch
    %1486 = sbr.rel (0) target = $region25
  $region24: #{rnn_model_forward.1} parent=0 // pred_region
    _
  $region25: #{rnn_model_forward.1} parent=0 // pred_fallthru
    _
  // Predicated region
  $region26: #{rnn_model_forward.1} parent=0 // pred_check
    _
  $region27: #{rnn_model_forward.1} parent=0 // pred_check_branch
    %1488 = sbr.rel (0) target = $region29
  $region28: #{rnn_model_forward.1} parent=0 // pred_region
    _
  $region29: #{rnn_model_forward.1} parent=0 // pred_fallthru
    _

</llo_original>
